<compile_context>
chip_gen: v7x
topology: tpu7x:2x2x1
jax: 0.10.0
libtpu: 0.0.40
codegen_flags: <defaults>
</compile_context>

<pallas_src>
import functools

import numpy as np
import jax
import jax.numpy as jnp
from jax.experimental import pallas as pl
from jax.experimental.pallas import tpu as pltpu


def _round_up(v, m):
    return ((v + m - 1) // m) * m


def _vmem_limit_bytes():
    """Per-generation scoped-VMEM budget (~5/8 of physical capacity)."""
    cap = 64 * 1024 * 1024                      # conservative fallback (v7x size)
    try:
        info = pltpu.get_tpu_info()
        for attr in ("vmem_capacity_bytes", "vmem_size_bytes", "vmem_bytes"):
            val = getattr(info, attr, None)
            if val:
                cap = int(val)
                break
    except Exception:
        pass
    return (cap * 5) // 8                       # ~40 MiB v7x, ~80 MiB v5e/v6e


# ---------------------------------------------------------------------------
# Fused forward kernel (single VMEM-resident block, no grid)
# ---------------------------------------------------------------------------
def _fused_forward_kernel(xcat_ref, an_ref, ars_ref, w1b_ref, b1c_ref,
                          w2_ref, b2_ref, wbt_ref, bb_ref, out_ref,
                          *, hdim, odim, out_w):
    """Output slab layout (lane-dense, width = out_w >= 128):
         [:, 0:H]          z  (= hidden_emb = relu(gcn1(x)))
         [:, H:H+O]        h  (= relu(gcn2(z)))
         [:, H+O:H+O+2]    ret   = disc(g,   z,  z_a)
         [:, H+O+2:H+O+4]  ret_a = disc(g_a, z_a, z )
         [:, H+O+4:]       zero padding
    """
    n = xcat_ref.shape[0]
    f32, bf16 = jnp.float32, jnp.bfloat16

    an = an_ref[...]            # bf16 (N,N)  normalized adjacency (GCN)
    ars = ars_ref[...]          # bf16 (N,N)  raw adjacency / max(rowsum, 1)
    b1c = b1c_ref[...]          # f32  (1,2H) [b1 | b1]
    b2 = b2_ref[...]            # f32  (1,O)
    bb = bb_ref[...]            # f32  (1,1)  Bilinear bias

    # ---- GCN layer 1 for x and permuted x in one shot:
    #      xcat = [x | x_a], w1blk = blockdiag(W1, W1)  =>  xw2 = [x@W1 | xa@W1]
    #      then one lane-concatenated N x N propagation (2H output lanes). ----
    xw2 = jnp.dot(xcat_ref[...], w1b_ref[...], preferred_element_type=f32)
    zz = jnp.maximum(
        jnp.dot(an, xw2.astype(bf16), preferred_element_type=f32) + b1c, 0.0)
    z = zz[:, :hdim]            # relu(gcn1(x))   == hidden_emb   (f32)
    z_a = zz[:, hdim:]          # relu(gcn1(x_a))                 (f32)

    # ---- GCN layer 2 on z ----
    zw = jnp.dot(z.astype(bf16), w2_ref[...], preferred_element_type=f32)
    h = jnp.maximum(
        jnp.dot(an, zw.astype(bf16), preferred_element_type=f32) + b2, 0.0)

    # ---- AvgReadout for both summaries in ONE lane-concatenated matmul.
    #      Row normalisation of A_raw already folded in on the host. ----
    gg = jnp.dot(ars, zz.astype(bf16), preferred_element_type=f32)

    def _l2_sigmoid(gpart):     # f32 normalize (eps matches F.normalize 1e-12)
        ss = jnp.sum(gpart * gpart, axis=1, keepdims=True)
        return jax.nn.sigmoid(gpart * jax.lax.rsqrt(jnp.maximum(ss, 1e-24)))

    g = _l2_sigmoid(gg[:, :hdim])
    g_a = _l2_sigmoid(gg[:, hdim:])

    # ---- Bilinear discriminator: both summary projections in one matmul. ----
    gcat = jnp.concatenate([g, g_a], axis=0).astype(bf16)        # (2N, H)
    cw = jnp.dot(gcat, wbt_ref[...], preferred_element_type=f32)  # (2N, H)
    cw_g = cw[:n, :]
    cw_ga = cw[n:, :]

    s1 = jnp.sum(z * cw_g, axis=1, keepdims=True) + bb           # ret[:, 0]
    s2 = jnp.sum(z_a * cw_g, axis=1, keepdims=True) + bb         # ret[:, 1]
    s3 = jnp.sum(z_a * cw_ga, axis=1, keepdims=True) + bb        # ret_a[:, 0]
    s4 = jnp.sum(z * cw_ga, axis=1, keepdims=True) + bb          # ret_a[:, 1]

    # Place the four score columns into one (N, 4) block without width-1
    # lane concatenation (broadcasted one-hot selects).
    lane4 = jax.lax.broadcasted_iota(jnp.int32, (1, 4), 1)
    scores = (jnp.where(lane4 == 0, s1, 0.0) + jnp.where(lane4 == 1, s2, 0.0)
              + jnp.where(lane4 == 2, s3, 0.0) + jnp.where(lane4 == 3, s4, 0.0))

    # ---- Assemble the full 128-lane row in registers; ONE unmasked store. ----
    pieces = [z, h, scores]
    used = hdim + odim + 4
    if out_w > used:            # guard against a degenerate zero-width pad
        pieces.append(jnp.zeros((n, out_w - used), f32))
    out_ref[...] = jnp.concatenate(pieces, axis=1)


def _fused_forward_call(x, x_a, a_norm, a_raw, params):
    n, idim = x.shape
    hdim = params["W1"].shape[1]
    odim = params["W2"].shape[1]
    out_w = max(128, _round_up(hdim + odim + 4, 128))   # lane-dense output slab

    f32, bf16 = jnp.float32, jnp.bfloat16

    # Host-side prep: fold AvgReadout rowsum into the adjacency, cast the MXU
    # operands to bf16, build [x | x_a] and blockdiag(W1, W1).
    rs = jnp.sum(a_raw, axis=1, keepdims=True)
    ars = (a_raw / jnp.where(rs == 0.0, 1.0, rs)).astype(bf16)
    an = a_norm.astype(bf16)

    xcat = jnp.concatenate([x.astype(f32), x_a.astype(f32)], axis=1).astype(bf16)
    w1 = params["W1"].astype(f32)
    zw1 = jnp.zeros_like(w1)
    w1blk = jnp.concatenate(
        [jnp.concatenate([w1, zw1], axis=1),
         jnp.concatenate([zw1, w1], axis=1)], axis=0).astype(bf16)   # (2I, 2H)
    b1cat = jnp.concatenate(
        [params["b1"], params["b1"]]).reshape(1, 2 * hdim).astype(f32)
    w2 = params["W2"].astype(bf16)
    b2 = params["b2"].reshape(1, odim).astype(f32)
    wbt = jnp.transpose(params["Wb"]).astype(bf16)       # pre-transposed Bilinear W
    bb = jnp.reshape(jnp.asarray(params["bb"], f32), (1, 1))

    vspec = pl.BlockSpec(memory_space=pltpu.MemorySpace.VMEM)
    slab = pl.pallas_call(
        functools.partial(_fused_forward_kernel, hdim=hdim, odim=odim, out_w=out_w),
        out_shape=jax.ShapeDtypeStruct((n, out_w), f32),
        in_specs=[vspec] * 9,
        out_specs=vspec,
        compiler_params=pltpu.CompilerParams(vmem_limit_bytes=_vmem_limit_bytes()),
    )(xcat, an, ars, w1blk, b1cat, w2, b2, wbt, bb)
    return slab, hdim, odim


# ---------------------------------------------------------------------------
# Host-side glue (adjacency build + permutation + slab unpacking)
# ---------------------------------------------------------------------------
def build_adjacencies(edge_index, num_nodes):
    row, col = edge_index
    # raw adjacency used by AvgReadout (values = 1 per edge, duplicates summed)
    a_raw = jnp.zeros((num_nodes, num_nodes), jnp.float32).at[row, col].add(1.0)
    # GCNConv: add self loops, symmetric normalization; messages src -> tgt
    a_msg = (jnp.zeros((num_nodes, num_nodes), jnp.float32).at[col, row].add(1.0)
             + jnp.eye(num_nodes, dtype=jnp.float32))
    deg = jnp.sum(a_msg, axis=1)
    d_inv_sqrt = jnp.where(deg > 0, deg ** -0.5, 0.0)
    a_norm = d_inv_sqrt[:, None] * a_msg * d_inv_sqrt[None, :]
    return a_raw, a_norm


def gnn_representation_forward(params, x, edge_index):
    num_nodes = x.shape[0]
    a_raw, a_norm = build_adjacencies(edge_index, num_nodes)

    # permutation(x, seed=42) — host-side, matches the torch module
    np.random.seed(42)
    ids = np.random.permutation(np.arange(num_nodes))
    x_a = x[jnp.asarray(ids)]

    slab, hdim, odim = _fused_forward_call(x, x_a, a_norm, a_raw, params)
    base = hdim + odim
    z = slab[:, :hdim]
    h = slab[:, hdim:base]
    ret = slab[:, base:base + 2]
    ret_a = slab[:, base + 2:base + 4]
    return z, h, ret, ret_a


# Pure-jnp f32 reference (for sanity checking the Pallas path)
def reference_forward(params, x, edge_index):
    num_nodes = x.shape[0]
    a_raw, a_norm = build_adjacencies(edge_index, num_nodes)

    def gcn(xin, W, b):
        return jnp.maximum(a_norm @ (xin @ W) + b, 0.0)

    def readout(emb):
        rs = jnp.sum(a_raw, axis=1, keepdims=True)
        rs = jnp.where(rs == 0.0, 1.0, rs)
        g = (a_raw @ emb) / rs
        g = g / jnp.maximum(jnp.linalg.norm(g, axis=1, keepdims=True), 1e-12)
        return jax.nn.sigmoid(g)

    def disc(c, h1, h2):
        s1 = jnp.sum((h1 @ params["Wb"]) * c, axis=1, keepdims=True) + params["bb"]
        s2 = jnp.sum((h2 @ params["Wb"]) * c, axis=1, keepdims=True) + params["bb"]
        return jnp.concatenate([s1, s2], axis=1)

    z = gcn(x, params["W1"], params["b1"])
    h = gcn(z, params["W2"], params["b2"])
    np.random.seed(42)
    ids = np.random.permutation(np.arange(num_nodes))
    z_a = gcn(x[jnp.asarray(ids)], params["W1"], params["b1"])
    g, g_a = readout(z), readout(z_a)
    return z, h, disc(g, z, z_a), disc(g_a, z_a, z)


# ---------------------------------------------------------------------------
if __name__ == "__main__":
    N, INPUT_DIM, HIDDEN_DIM, OUTPUT_DIM = 64, 16, 32, 16

    # Deterministic k-neighbor-style edge list.
    # TODO(synk): sklearn NearestNeighbors kNN graph construction has no Pallas
    # equivalent; a deterministic ring-offset edge list is used instead.
    offsets = np.array([1, 3, 7])
    row = np.repeat(np.arange(N), len(offsets))
    col = ((np.arange(N)[:, None] + offsets[None, :]) % N).reshape(-1)
    edge_index = (jnp.asarray(row, jnp.int32), jnp.asarray(col, jnp.int32))

    key = jax.random.PRNGKey(0)
    kx, k1, k2, k3 = jax.random.split(key, 4)
    x = jax.random.normal(kx, (N, INPUT_DIM), jnp.float32)

    lim_b = np.sqrt(6.0 / (HIDDEN_DIM + HIDDEN_DIM))  # xavier_uniform for Bilinear
    params = {
        "W1": jax.random.normal(k1, (INPUT_DIM, HIDDEN_DIM), jnp.float32)
              * (1.0 / np.sqrt(INPUT_DIM)),
        "b1": jnp.zeros((HIDDEN_DIM,), jnp.float32),
        "W2": jax.random.normal(k2, (HIDDEN_DIM, OUTPUT_DIM), jnp.float32)
              * (1.0 / np.sqrt(HIDDEN_DIM)),
        "b2": jnp.zeros((OUTPUT_DIM,), jnp.float32),
        "Wb": jax.random.uniform(k3, (HIDDEN_DIM, HIDDEN_DIM), jnp.float32,
                                 minval=-lim_b, maxval=lim_b),
        "bb": jnp.float32(0.0),  # Discriminator bias filled with 0.0
    }

    hidden_emb, h, ret, ret_a = gnn_representation_forward(params, x, edge_index)
    jax.block_until_ready((hidden_emb, h, ret, ret_a))

    # sanity check vs the pure-f32 jnp reference (kernel uses bf16 MXU operands)
    r_hidden, r_h, r_ret, r_ret_a = reference_forward(params, x, edge_index)
    assert hidden_emb.shape == (N, HIDDEN_DIM) and h.shape == (N, OUTPUT_DIM)
    assert ret.shape == (N, 2) and ret_a.shape == (N, 2)
    np.testing.assert_allclose(np.asarray(hidden_emb), np.asarray(r_hidden),
                               rtol=2e-2, atol=2e-2)
    np.testing.assert_allclose(np.asarray(h), np.asarray(r_h),
                               rtol=2e-2, atol=2e-2)
    # discriminator scores accumulate bf16 rounding over four matmul stages
    np.testing.assert_allclose(np.asarray(ret), np.asarray(r_ret),
                               rtol=3e-2, atol=6e-2)
    np.testing.assert_allclose(np.asarray(ret_a), np.asarray(r_ret_a),
                               rtol=3e-2, atol=6e-2)

    print("KERNEL_OK")
</pallas_src>

<mosaic_0001>
module attributes {stable_mosaic.version = 11 : i64} {
  func.func @_fused_forward_kernel(%arg0: memref<64x32xbf16, #tpu.memory_space<vmem>>, %arg1: memref<64x64xbf16, #tpu.memory_space<vmem>>, %arg2: memref<64x64xbf16, #tpu.memory_space<vmem>>, %arg3: memref<32x64xbf16, #tpu.memory_space<vmem>>, %arg4: memref<1x64xf32, #tpu.memory_space<vmem>>, %arg5: memref<32x16xbf16, #tpu.memory_space<vmem>>, %arg6: memref<1x16xf32, #tpu.memory_space<vmem>>, %arg7: memref<32x32xbf16, #tpu.memory_space<vmem>>, %arg8: memref<1x1xf32, #tpu.memory_space<vmem>>, %arg9: memref<64x128xf32, #tpu.memory_space<vmem>>) attributes {dimension_semantics = [], scalar_prefetch = 0 : i64, scratch_operands = 0 : i64, tpu.core_type = #tpu.core_type<tc>} {
    %c0 = arith.constant 0 : index
    %c0_0 = arith.constant 0 : index
    %0 = vector.load %arg1[%c0, %c0_0] : memref<64x64xbf16, #tpu.memory_space<vmem>>, vector<64x64xbf16>
    %c0_1 = arith.constant 0 : index
    %c0_2 = arith.constant 0 : index
    %1 = vector.load %arg2[%c0_1, %c0_2] : memref<64x64xbf16, #tpu.memory_space<vmem>>, vector<64x64xbf16>
    %c0_3 = arith.constant 0 : index
    %c0_4 = arith.constant 0 : index
    %2 = vector.load %arg4[%c0_3, %c0_4] : memref<1x64xf32, #tpu.memory_space<vmem>>, vector<1x64xf32>
    %c0_5 = arith.constant 0 : index
    %c0_6 = arith.constant 0 : index
    %3 = vector.load %arg6[%c0_5, %c0_6] : memref<1x16xf32, #tpu.memory_space<vmem>>, vector<1x16xf32>
    %c0_7 = arith.constant 0 : index
    %c0_8 = arith.constant 0 : index
    %4 = vector.load %arg8[%c0_7, %c0_8] : memref<1x1xf32, #tpu.memory_space<vmem>>, vector<1x1xf32>
    %c0_9 = arith.constant 0 : index
    %c0_10 = arith.constant 0 : index
    %5 = vector.load %arg0[%c0_9, %c0_10] : memref<64x32xbf16, #tpu.memory_space<vmem>>, vector<64x32xbf16>
    %c0_11 = arith.constant 0 : index
    %c0_12 = arith.constant 0 : index
    %6 = vector.load %arg3[%c0_11, %c0_12] : memref<32x64xbf16, #tpu.memory_space<vmem>>, vector<32x64xbf16>
    %cst = arith.constant dense<0.000000e+00> : vector<64x64xf32>
    %7 = tpu.matmul %5, %6, %cst {dimension_numbers = #tpu.dot_dimension_numbers<[1], [0], [0], [1], [0, 0, 1, 1], [], []>} : vector<64x32xbf16>, vector<32x64xbf16>, vector<64x64xf32> -> vector<64x64xf32>
    %8 = arith.truncf %7 : vector<64x64xf32> to vector<64x64xbf16>
    %cst_13 = arith.constant dense<0.000000e+00> : vector<64x64xf32>
    %9 = tpu.matmul %0, %8, %cst_13 {dimension_numbers = #tpu.dot_dimension_numbers<[1], [0], [0], [1], [0, 0, 1, 1], [], []>} : vector<64x64xbf16>, vector<64x64xbf16>, vector<64x64xf32> -> vector<64x64xf32>
    %10 = vector.broadcast %2 : vector<1x64xf32> to vector<64x64xf32>
    %11 = arith.addf %9, %10 : vector<64x64xf32>
    %cst_14 = arith.constant 0.000000e+00 : f32
    %12 = vector.broadcast %cst_14 : f32 to vector<64x64xf32>
    %13 = arith.maximumf %11, %12 : vector<64x64xf32>
    %14 = vector.extract_strided_slice %13 {offsets = [0, 0], sizes = [64, 32], strides = [1, 1]} : vector<64x64xf32> to vector<64x32xf32>
    %15 = vector.extract_strided_slice %13 {offsets = [0, 32], sizes = [64, 32], strides = [1, 1]} : vector<64x64xf32> to vector<64x32xf32>
    %16 = arith.truncf %14 : vector<64x32xf32> to vector<64x32xbf16>
    %c0_15 = arith.constant 0 : index
    %c0_16 = arith.constant 0 : index
    %17 = vector.load %arg5[%c0_15, %c0_16] : memref<32x16xbf16, #tpu.memory_space<vmem>>, vector<32x16xbf16>
    %cst_17 = arith.constant dense<0.000000e+00> : vector<64x16xf32>
    %18 = tpu.matmul %16, %17, %cst_17 {dimension_numbers = #tpu.dot_dimension_numbers<[1], [0], [0], [1], [0, 0, 1, 1], [], []>} : vector<64x32xbf16>, vector<32x16xbf16>, vector<64x16xf32> -> vector<64x16xf32>
    %19 = arith.truncf %18 : vector<64x16xf32> to vector<64x16xbf16>
    %cst_18 = arith.constant dense<0.000000e+00> : vector<64x16xf32>
    %20 = tpu.matmul %0, %19, %cst_18 {dimension_numbers = #tpu.dot_dimension_numbers<[1], [0], [0], [1], [0, 0, 1, 1], [], []>} : vector<64x64xbf16>, vector<64x16xbf16>, vector<64x16xf32> -> vector<64x16xf32>
    %21 = vector.broadcast %3 : vector<1x16xf32> to vector<64x16xf32>
    %22 = arith.addf %20, %21 : vector<64x16xf32>
    %cst_19 = arith.constant 0.000000e+00 : f32
    %23 = vector.broadcast %cst_19 : f32 to vector<64x16xf32>
    %24 = arith.maximumf %22, %23 : vector<64x16xf32>
    %25 = arith.truncf %13 : vector<64x64xf32> to vector<64x64xbf16>
    %cst_20 = arith.constant dense<0.000000e+00> : vector<64x64xf32>
    %26 = tpu.matmul %1, %25, %cst_20 {dimension_numbers = #tpu.dot_dimension_numbers<[1], [0], [0], [1], [0, 0, 1, 1], [], []>} : vector<64x64xbf16>, vector<64x64xbf16>, vector<64x64xf32> -> vector<64x64xf32>
    %27 = vector.extract_strided_slice %26 {offsets = [0, 0], sizes = [64, 32], strides = [1, 1]} : vector<64x64xf32> to vector<64x32xf32>
    %28 = arith.mulf %27, %27 : vector<64x32xf32>
    %cst_21 = arith.constant dense<0.000000e+00> : vector<64xf32>
    %29 = vector.multi_reduction <add>, %28, %cst_21 [1] : vector<64x32xf32> to vector<64xf32>
    %30 = vector.shape_cast %29 : vector<64xf32> to vector<64x1xf32>
    %cst_22 = arith.constant 1.000000e-24 : f32
    %31 = vector.broadcast %cst_22 : f32 to vector<64x1xf32>
    %32 = arith.maximumf %30, %31 : vector<64x1xf32>
    %33 = math.rsqrt %32 : vector<64x1xf32>
    %34 = vector.broadcast %33 : vector<64x1xf32> to vector<64x32xf32>
    %35 = arith.mulf %27, %34 : vector<64x32xf32>
    %36 = arith.negf %35 : vector<64x32xf32>
    %37 = math.exp %36 : vector<64x32xf32>
    %cst_23 = arith.constant 1.000000e+00 : f32
    %38 = vector.broadcast %cst_23 : f32 to vector<64x32xf32>
    %39 = arith.addf %38, %37 : vector<64x32xf32>
    %40 = arith.divf %38, %39 : vector<64x32xf32>
    %41 = vector.extract_strided_slice %26 {offsets = [0, 32], sizes = [64, 32], strides = [1, 1]} : vector<64x64xf32> to vector<64x32xf32>
    %42 = arith.mulf %41, %41 : vector<64x32xf32>
    %cst_24 = arith.constant dense<0.000000e+00> : vector<64xf32>
    %43 = vector.multi_reduction <add>, %42, %cst_24 [1] : vector<64x32xf32> to vector<64xf32>
    %44 = vector.shape_cast %43 : vector<64xf32> to vector<64x1xf32>
    %cst_25 = arith.constant 1.000000e-24 : f32
    %45 = vector.broadcast %cst_25 : f32 to vector<64x1xf32>
    %46 = arith.maximumf %44, %45 : vector<64x1xf32>
    %47 = math.rsqrt %46 : vector<64x1xf32>
    %48 = vector.broadcast %47 : vector<64x1xf32> to vector<64x32xf32>
    %49 = arith.mulf %41, %48 : vector<64x32xf32>
    %50 = arith.negf %49 : vector<64x32xf32>
    %51 = math.exp %50 : vector<64x32xf32>
    %cst_26 = arith.constant 1.000000e+00 : f32
    %52 = vector.broadcast %cst_26 : f32 to vector<64x32xf32>
    %53 = arith.addf %52, %51 : vector<64x32xf32>
    %54 = arith.divf %52, %53 : vector<64x32xf32>
    %55 = tpu.concatenate %40, %54 in 0 : vector<64x32xf32>, vector<64x32xf32> -> vector<128x32xf32>
    %56 = arith.truncf %55 : vector<128x32xf32> to vector<128x32xbf16>
    %c0_27 = arith.constant 0 : index
    %c0_28 = arith.constant 0 : index
    %57 = vector.load %arg7[%c0_27, %c0_28] : memref<32x32xbf16, #tpu.memory_space<vmem>>, vector<32x32xbf16>
    %cst_29 = arith.constant dense<0.000000e+00> : vector<128x32xf32>
    %58 = tpu.matmul %56, %57, %cst_29 {dimension_numbers = #tpu.dot_dimension_numbers<[1], [0], [0], [1], [0, 0, 1, 1], [], []>} : vector<128x32xbf16>, vector<32x32xbf16>, vector<128x32xf32> -> vector<128x32xf32>
    %59 = vector.extract_strided_slice %58 {offsets = [0, 0], sizes = [64, 32], strides = [1, 1]} : vector<128x32xf32> to vector<64x32xf32>
    %60 = vector.extract_strided_slice %58 {offsets = [64, 0], sizes = [64, 32], strides = [1, 1]} : vector<128x32xf32> to vector<64x32xf32>
    %61 = arith.mulf %14, %59 : vector<64x32xf32>
    %cst_30 = arith.constant dense<0.000000e+00> : vector<64xf32>
    %62 = vector.multi_reduction <add>, %61, %cst_30 [1] : vector<64x32xf32> to vector<64xf32>
    %63 = vector.shape_cast %62 : vector<64xf32> to vector<64x1xf32>
    %64 = vector.broadcast %4 : vector<1x1xf32> to vector<64x1xf32>
    %65 = arith.addf %63, %64 : vector<64x1xf32>
    %66 = arith.mulf %15, %59 : vector<64x32xf32>
    %cst_31 = arith.constant dense<0.000000e+00> : vector<64xf32>
    %67 = vector.multi_reduction <add>, %66, %cst_31 [1] : vector<64x32xf32> to vector<64xf32>
    %68 = vector.shape_cast %67 : vector<64xf32> to vector<64x1xf32>
    %69 = vector.broadcast %4 : vector<1x1xf32> to vector<64x1xf32>
    %70 = arith.addf %68, %69 : vector<64x1xf32>
    %71 = arith.mulf %15, %60 : vector<64x32xf32>
    %cst_32 = arith.constant dense<0.000000e+00> : vector<64xf32>
    %72 = vector.multi_reduction <add>, %71, %cst_32 [1] : vector<64x32xf32> to vector<64xf32>
    %73 = vector.shape_cast %72 : vector<64xf32> to vector<64x1xf32>
    %74 = vector.broadcast %4 : vector<1x1xf32> to vector<64x1xf32>
    %75 = arith.addf %73, %74 : vector<64x1xf32>
    %76 = arith.mulf %14, %60 : vector<64x32xf32>
    %cst_33 = arith.constant dense<0.000000e+00> : vector<64xf32>
    %77 = vector.multi_reduction <add>, %76, %cst_33 [1] : vector<64x32xf32> to vector<64xf32>
    %78 = vector.shape_cast %77 : vector<64xf32> to vector<64x1xf32>
    %79 = vector.broadcast %4 : vector<1x1xf32> to vector<64x1xf32>
    %80 = arith.addf %78, %79 : vector<64x1xf32>
    %81 = tpu.iota {dimensions = array<i32: 1>} : vector<1x4xi32>
    %c0_i32 = arith.constant 0 : i32
    %82 = vector.broadcast %c0_i32 : i32 to vector<1x4xi32>
    %83 = arith.cmpi eq, %81, %82 : vector<1x4xi32>
    %cst_34 = arith.constant 0.000000e+00 : f32
    %84 = vector.shape_cast %83 : vector<1x4xi1> to vector<1x4xi1>
    %85 = vector.broadcast %84 : vector<1x4xi1> to vector<64x4xi1>
    %86 = vector.shape_cast %65 : vector<64x1xf32> to vector<64x1xf32>
    %87 = vector.broadcast %86 : vector<64x1xf32> to vector<64x4xf32>
    %88 = vector.broadcast %cst_34 : f32 to vector<64x4xf32>
    %89 = arith.select %85, %87, %88 : vector<64x4xi1>, vector<64x4xf32>
    %c1_i32 = arith.constant 1 : i32
    %90 = vector.broadcast %c1_i32 : i32 to vector<1x4xi32>
    %91 = arith.cmpi eq, %81, %90 : vector<1x4xi32>
    %cst_35 = arith.constant 0.000000e+00 : f32
    %92 = vector.shape_cast %91 : vector<1x4xi1> to vector<1x4xi1>
    %93 = vector.broadcast %92 : vector<1x4xi1> to vector<64x4xi1>
    %94 = vector.shape_cast %70 : vector<64x1xf32> to vector<64x1xf32>
    %95 = vector.broadcast %94 : vector<64x1xf32> to vector<64x4xf32>
    %96 = vector.broadcast %cst_35 : f32 to vector<64x4xf32>
    %97 = arith.select %93, %95, %96 : vector<64x4xi1>, vector<64x4xf32>
    %98 = arith.addf %89, %97 : vector<64x4xf32>
    %c2_i32 = arith.constant 2 : i32
    %99 = vector.broadcast %c2_i32 : i32 to vector<1x4xi32>
    %100 = arith.cmpi eq, %81, %99 : vector<1x4xi32>
    %cst_36 = arith.constant 0.000000e+00 : f32
    %101 = vector.shape_cast %100 : vector<1x4xi1> to vector<1x4xi1>
    %102 = vector.broadcast %101 : vector<1x4xi1> to vector<64x4xi1>
    %103 = vector.shape_cast %75 : vector<64x1xf32> to vector<64x1xf32>
    %104 = vector.broadcast %103 : vector<64x1xf32> to vector<64x4xf32>
    %105 = vector.broadcast %cst_36 : f32 to vector<64x4xf32>
    %106 = arith.select %102, %104, %105 : vector<64x4xi1>, vector<64x4xf32>
    %107 = arith.addf %98, %106 : vector<64x4xf32>
    %c3_i32 = arith.constant 3 : i32
    %108 = vector.broadcast %c3_i32 : i32 to vector<1x4xi32>
    %109 = arith.cmpi eq, %81, %108 : vector<1x4xi32>
    %cst_37 = arith.constant 0.000000e+00 : f32
    %110 = vector.shape_cast %109 : vector<1x4xi1> to vector<1x4xi1>
    %111 = vector.broadcast %110 : vector<1x4xi1> to vector<64x4xi1>
    %112 = vector.shape_cast %80 : vector<64x1xf32> to vector<64x1xf32>
    %113 = vector.broadcast %112 : vector<64x1xf32> to vector<64x4xf32>
    %114 = vector.broadcast %cst_37 : f32 to vector<64x4xf32>
    %115 = arith.select %111, %113, %114 : vector<64x4xi1>, vector<64x4xf32>
    %116 = arith.addf %107, %115 : vector<64x4xf32>
    %cst_38 = arith.constant 0.000000e+00 : f32
    %117 = vector.broadcast %cst_38 : f32 to vector<64x76xf32>
    %118 = tpu.concatenate %14, %24, %116, %117 in 1 : vector<64x32xf32>, vector<64x16xf32>, vector<64x4xf32>, vector<64x76xf32> -> vector<64x128xf32>
    %c0_39 = arith.constant 0 : index
    %c0_40 = arith.constant 0 : index
    %119 = vector.load %arg9[%c0_39, %c0_40] : memref<64x128xf32, #tpu.memory_space<vmem>>, vector<64x128xf32>
    tpu.vector_store %arg9[%c0_39, %c0_40], %118 {strides = array<i32>} : memref<64x128xf32, #tpu.memory_space<vmem>>, vector<64x128xf32>,
    return
  }
}

</mosaic_0001>

<llo_original>
// kernel: tpu_custom_call.1
$region0: #{tpu_custom_call.1}
  #allocation0 [shape = 'u32[]', space=smem, size = 0x4, offset = 0x4, fixed_abs, tag = 'smem constant byte address 0x4 - core index']
  #allocation1 [shape = 'u32[144,128]{1,0:T(1,128)}', space=vmem, size = 0x12000, scoped, tag = 'internal scratch']
  #allocation2 [shape = 'f32[1,1]{1,0:T(1,128)S(1)}', space=vmem, size = 0x200, scoped, tag = 'scoped memory for tpu_custom_call.1']
  %s0 = inlined_call_operand.vmem [shape: bf16[64,32], index: 0, kind: input, shape index: {}]
  %s1 = inlined_call_operand.vmem [shape: bf16[64,64], index: 1, kind: input, shape index: {}]
  %s2 = inlined_call_operand.vmem [shape: bf16[64,64], index: 2, kind: input, shape index: {}]
  %s3 = inlined_call_operand.vmem [shape: bf16[32,64], index: 3, kind: input, shape index: {}]
  %s4 = inlined_call_operand.vmem [shape: f32[1,64], index: 4, kind: input, shape index: {}]
  %s5 = inlined_call_operand.vmem [shape: bf16[32,16], index: 5, kind: input, shape index: {}]
  %s6 = inlined_call_operand.vmem [shape: f32[1,16], index: 6, kind: input, shape index: {}]
  %s7 = inlined_call_operand.vmem [shape: bf16[32,32], index: 7, kind: input, shape index: {}]
  %s8 = inlined_call_operand.<no memory space> [shape: f32[1,1], index: 8, kind: input, shape index: {}]
  %s9 = inlined_call_operand.hbm [shape: f32[64,128], index: 9, kind: output, shape index: {}]
  %s10 = sld [smem:[#allocation0]]
  $region46: #{tpu_custom_call.1} parent=0
    _
  %s12 = ssub.s32 1, %s10
  %s13 = scalar_select 0, %s12, %s10
  %v14 = vstv %s8
  %15 = vst [vmem:[#allocation2] sm:$0x1] %v14
  $region1: #{tpu_custom_call.1} parent=0
    #allocation3 [shape = 'u8[32768]{0}', space=vmem, size = 0x8000, scoped, tag = 'output window, operand 0, single buffered']
    #allocation4 [shape = 's32[1]{0}', space=sflag, size = 0x4, scoped, tag = 'scoped memory for tpu_custom_call.1']
    %16 = vsyncpa [#allocation4], 0
    // Predicated region
    $region2: #{tpu_custom_call.1} parent=1 // pred_check
      _
    $region3: #{tpu_custom_call.1} parent=1 // pred_check_branch
      %18 = sbr.rel (0) target = $region5
    $region4: #{tpu_custom_call.1} parent=1 // pred_region
      _
    $region5: #{tpu_custom_call.1} parent=1 // pred_fallthru
      _
    // Predicated region
    $region6: #{tpu_custom_call.1} parent=1 // pred_check
      _
    $region7: #{tpu_custom_call.1} parent=1 // pred_check_branch
      %20 = sbr.rel (0) target = $region9
    $region8: #{tpu_custom_call.1} parent=1 // pred_region
      _
    $region9: #{tpu_custom_call.1} parent=1 // pred_fallthru
      _
    // Predicated region
    $region10: #{tpu_custom_call.1} parent=1 // pred_check
      _
    $region11: #{tpu_custom_call.1} parent=1 // pred_check_branch
      %22 = sbr.rel (0) target = $region13
    $region12: #{tpu_custom_call.1} parent=1 // pred_region
      _
    $region13: #{tpu_custom_call.1} parent=1 // pred_fallthru
      _
    // Predicated region
    $region14: #{tpu_custom_call.1} parent=1 // pred_check
      _
    $region15: #{tpu_custom_call.1} parent=1 // pred_check_branch
      %24 = sbr.rel (0) target = $region17
    $region16: #{tpu_custom_call.1} parent=1 // pred_region
      _
    $region17: #{tpu_custom_call.1} parent=1 // pred_fallthru
      _
    // Predicated region
    $region18: #{tpu_custom_call.1} parent=1 // pred_check
      _
    $region19: #{tpu_custom_call.1} parent=1 // pred_check_branch
      %26 = sbr.rel (0) target = $region21
    $region20: #{tpu_custom_call.1} parent=1 // pred_region
      _
    $region21: #{tpu_custom_call.1} parent=1 // pred_fallthru
      _
    // Predicated region
    $region22: #{tpu_custom_call.1} parent=1 // pred_check
      _
    $region23: #{tpu_custom_call.1} parent=1 // pred_check_branch
      %28 = sbr.rel (0) target = $region25
    $region24: #{tpu_custom_call.1} parent=1 // pred_region
      _
    $region25: #{tpu_custom_call.1} parent=1 // pred_fallthru
      _
    // Predicated region
    $region26: #{tpu_custom_call.1} parent=1 // pred_check
      _
    $region27: #{tpu_custom_call.1} parent=1 // pred_check_branch
      %30 = sbr.rel (0) target = $region29
    $region28: #{tpu_custom_call.1} parent=1 // pred_region
      _
    $region29: #{tpu_custom_call.1} parent=1 // pred_fallthru
      _
    // Predicated region
    $region30: #{tpu_custom_call.1} parent=1 // pred_check
      _
    $region31: #{tpu_custom_call.1} parent=1 // pred_check_branch
      %32 = sbr.rel (0) target = $region33
    $region32: #{tpu_custom_call.1} parent=1 // pred_region
      _
    $region33: #{tpu_custom_call.1} parent=1 // pred_fallthru
      _
    // Predicated region
    $region34: #{tpu_custom_call.1} parent=1 // pred_check
      _
    $region35: #{tpu_custom_call.1} parent=1 // pred_check_branch
      %34 = sbr.rel (0) target = $region37
    $region36: #{tpu_custom_call.1} parent=1 // pred_region
      _
    $region37: #{tpu_custom_call.1} parent=1 // pred_fallthru
      _
    %v36 = vld [vmem:[%s1] sm:$0xf]
    %v37 = vld [vmem:[%s1 + $0x4] sm:$0xf]
    %v38 = vld [vmem:[%s1 + $0x8] sm:$0xf]
    %v39 = vld [vmem:[%s1 + $0xc] sm:$0xf]
    %v40 = vld [vmem:[%s1 + $0x10] sm:$0xf]
    %v41 = vld [vmem:[%s1 + $0x14] sm:$0xf]
    %v42 = vld [vmem:[%s1 + $0x18] sm:$0xf]
    %v43 = vld [vmem:[%s1 + $0x1c] sm:$0xf]
    %v44 = vld [vmem:[%s2] sm:$0xf]
    %v45 = vld [vmem:[%s2 + $0x4] sm:$0xf]
    %v46 = vld [vmem:[%s2 + $0x8] sm:$0xf]
    %v47 = vld [vmem:[%s2 + $0xc] sm:$0xf]
    %v48 = vld [vmem:[%s2 + $0x10] sm:$0xf]
    %v49 = vld [vmem:[%s2 + $0x14] sm:$0xf]
    %v50 = vld [vmem:[%s2 + $0x18] sm:$0xf]
    %v51 = vld [vmem:[%s2 + $0x1c] sm:$0xf]
    %v52 = vld [vmem:[%s4] sm:$0x1]
    %v53 = vld [vmem:[%s6] sm:$0x1]
    %v54 = vld [vmem:[#allocation2] sm:$0x1]
    %v55 = vld [vmem:[%s0] sm:$0xf]
    %v56 = vld [vmem:[%s0 + $0x4] sm:$0xf]
    %v57 = vld [vmem:[%s0 + $0x8] sm:$0xf]
    %v58 = vld [vmem:[%s0 + $0xc] sm:$0xf]
    %v59 = vld [vmem:[%s0 + $0x10] sm:$0xf]
    %v60 = vld [vmem:[%s0 + $0x14] sm:$0xf]
    %v61 = vld [vmem:[%s0 + $0x18] sm:$0xf]
    %v62 = vld [vmem:[%s0 + $0x1c] sm:$0xf]
    %v63 = vld [vmem:[%s3] sm:$0xf]
    %v64 = vld [vmem:[%s3 + $0x4] sm:$0xf]
    %v65 = vld [vmem:[%s3 + $0x8] sm:$0xf]
    %v66 = vld [vmem:[%s3 + $0xc] sm:$0xf]
    %v75 = vunpack.c.l.b16 %v55
    %v76 = vunpack.c.l.b16 %v56
    %v77 = vunpack.c.l.b16 %v57
    %v78 = vunpack.c.l.b16 %v58
    %v79 = vunpack.c.l.b16 %v59
    %v80 = vunpack.c.l.b16 %v60
    %v81 = vunpack.c.l.b16 %v61
    %v82 = vunpack.c.l.b16 %v62
    %v83 = vpack.c.b16 %v76, %v75
    %v84 = vpack.c.b16 %v78, %v77
    %v85 = vpack.c.b16 %v80, %v79
    %v86 = vpack.c.b16 %v82, %v81
    %v91 = vunpack.c.l.b16 %v63
    %v92 = vunpack.c.l.b16 %v64
    %v93 = vunpack.c.l.b16 %v65
    %v94 = vunpack.c.l.b16 %v66
    %v95 = vpack.c.b16 %v92, %v91
    %v96 = vpack.c.b16 %v94, %v93
    %vm99 = vcmask 261120
    %v101 = vsel %vm99, %v83, 0
    %v104 = vsel %vm99, %v84, 0
    %v107 = vsel %vm99, %v85, 0
    %v110 = vsel %vm99, %v86, 0
    %112 = vmatprep.subr.bf16.mxu0 0
    %113 = vmatpush1.bf16.msra.mxu0 %v95
    %114 = vmatprep.subr.bf16.mxu0 0
    %115 = vmatpush1.bf16.msra.mxu0 %v96
    %116 = vmatprep.subr.bf16.mxu0 0
    %117 = vmatpush1.bf16.msra.mxu0 0
    %118 = vmatprep.subr.bf16.mxu0 0
    %119 = vmatpush1.bf16.msra.mxu0 0
    %120 = vmatprep.subr.bf16.mxu0 0
    %121 = vmatpush1.bf16.msra.mxu0 0
    %122 = vmatprep.subr.bf16.mxu0 0
    %123 = vmatpush1.bf16.msra.mxu0 0
    %124 = vmatprep.subr.bf16.mxu0 0
    %125 = vmatpush1.bf16.msra.mxu0 0
    %126 = vmatprep.subr.bf16.mxu0 0
    %127 = vmatpush1.bf16.msra.mxu0 0
    %128 = vmatprep.subr.bf16.mxu0 0
    %129 = vmatpush1.bf16.msra.mxu0 0
    %130 = vmatprep.subr.bf16.mxu0 0
    %131 = vmatpush1.bf16.msra.mxu0 0
    %132 = vmatprep.subr.bf16.mxu0 0
    %133 = vmatpush1.bf16.msra.mxu0 0
    %134 = vmatprep.subr.bf16.mxu0 0
    %135 = vmatpush1.bf16.msra.mxu0 0
    %136 = vmatprep.subr.bf16.mxu0 0
    %137 = vmatpush1.bf16.msra.mxu0 0
    %138 = vmatprep.subr.bf16.mxu0 0
    %139 = vmatpush1.bf16.msra.mxu0 0
    %140 = vmatprep.subr.bf16.mxu0 0
    %141 = vmatpush1.bf16.msra.mxu0 0
    %142 = vmatprep.subr.bf16.mxu0 0
    %143 = vmatpush1.bf16.msra.mxu0 0
    %144 = vmatprep.mubr.bf16.mxu0 0
    %145 = vmatmul.mubr.bf16.gmra.mrb[0].mxu0 %v101
    %v146 = vpop.f32.mrb[0].mxu0
    %v147 = vadd.f32 0.0, %v146
    %v148 = vpop.f32.mrb[0].mxu0
    %v149 = vpop.f32.mrb[0].mxu0
    %v150 = vadd.f32 0.0, %v149
    %v151 = vpop.f32.mrb[0].mxu0
    %152 = vmatprep.mubr.bf16.mxu0 0
    %153 = vmatmul.mubr.bf16.gmra.mrb[0].mxu0 %v104
    %v154 = vpop.f32.mrb[0].mxu0
    %v155 = vadd.f32 0.0, %v154
    %v156 = vpop.f32.mrb[0].mxu0
    %v157 = vpop.f32.mrb[0].mxu0
    %v158 = vadd.f32 0.0, %v157
    %v159 = vpop.f32.mrb[0].mxu0
    %160 = vmatprep.mubr.bf16.mxu0 0
    %161 = vmatmul.mubr.bf16.gmra.mrb[0].mxu0 %v107
    %v162 = vpop.f32.mrb[0].mxu0
    %v163 = vadd.f32 0.0, %v162
    %v164 = vpop.f32.mrb[0].mxu0
    %v165 = vpop.f32.mrb[0].mxu0
    %v166 = vadd.f32 0.0, %v165
    %v167 = vpop.f32.mrb[0].mxu0
    %168 = vmatprep.mubr.bf16.mxu0 0
    %169 = vmatmul.mubr.bf16.gmra.mrb[0].mxu0 %v110
    %v170 = vpop.f32.mrb[0].mxu0
    %v171 = vadd.f32 0.0, %v170
    %v172 = vpop.f32.mrb[0].mxu0
    %v173 = vpop.f32.mrb[0].mxu0
    %v174 = vadd.f32 0.0, %v173
    %v175 = vpop.f32.mrb[0].mxu0
    %176 = vdwg.mxu0
    %v177 = vpack.c.bf16 %v150, %v147
    %v178 = vpack.c.bf16 %v158, %v155
    %v179 = vpack.c.bf16 %v166, %v163
    %v180 = vpack.c.bf16 %v174, %v171
    %v182 = vlaneseq
    %v183 = vshrl.u32 %v182, 7
    %v184 = vsub.s32 0, %v183
    %v185 = vrot.slane %v52, %v184
    %v195 = vunpack.c.l.b16 %v36
    %v196 = vunpack.c.l.b16 %v37
    %v197 = vunpack.c.l.b16 %v38
    %v198 = vunpack.c.l.b16 %v39
    %v199 = vunpack.c.l.b16 %v40
    %v200 = vunpack.c.l.b16 %v41
    %v201 = vunpack.c.l.b16 %v42
    %v202 = vunpack.c.l.b16 %v43
    %v203 = vpack.c.b16 %v196, %v195
    %v204 = vpack.c.b16 %v198, %v197
    %v205 = vpack.c.b16 %v200, %v199
    %v206 = vpack.c.b16 %v202, %v201
    %vm207 = vcmask 523264
    %v209 = vsel %vm207, %v203, 0
    %v212 = vsel %vm207, %v204, 0
    %v215 = vsel %vm207, %v205, 0
    %v218 = vsel %vm207, %v206, 0
    %220 = vmatprep.subr.bf16.mxu0 0
    %221 = vmatpush1.bf16.msra.mxu0 %v177
    %222 = vmatprep.subr.bf16.mxu0 0
    %223 = vmatpush1.bf16.msra.mxu0 %v178
    %224 = vmatprep.subr.bf16.mxu0 0
    %225 = vmatpush1.bf16.msra.mxu0 %v179
    %226 = vmatprep.subr.bf16.mxu0 0
    %227 = vmatpush1.bf16.msra.mxu0 %v180
    %228 = vmatprep.subr.bf16.mxu0 0
    %229 = vmatpush1.bf16.msra.mxu0 0
    %230 = vmatprep.subr.bf16.mxu0 0
    %231 = vmatpush1.bf16.msra.mxu0 0
    %232 = vmatprep.subr.bf16.mxu0 0
    %233 = vmatpush1.bf16.msra.mxu0 0
    %234 = vmatprep.subr.bf16.mxu0 0
    %235 = vmatpush1.bf16.msra.mxu0 0
    %236 = vmatprep.subr.bf16.mxu0 0
    %237 = vmatpush1.bf16.msra.mxu0 0
    %238 = vmatprep.subr.bf16.mxu0 0
    %239 = vmatpush1.bf16.msra.mxu0 0
    %240 = vmatprep.subr.bf16.mxu0 0
    %241 = vmatpush1.bf16.msra.mxu0 0
    %242 = vmatprep.subr.bf16.mxu0 0
    %243 = vmatpush1.bf16.msra.mxu0 0
    %244 = vmatprep.subr.bf16.mxu0 0
    %245 = vmatpush1.bf16.msra.mxu0 0
    %246 = vmatprep.subr.bf16.mxu0 0
    %247 = vmatpush1.bf16.msra.mxu0 0
    %248 = vmatprep.subr.bf16.mxu0 0
    %249 = vmatpush1.bf16.msra.mxu0 0
    %250 = vmatprep.subr.bf16.mxu0 0
    %251 = vmatpush1.bf16.msra.mxu0 0
    %252 = vmatprep.mubr.bf16.mxu0 0
    %253 = vmatmul.mubr.bf16.gmra.mrb[0].mxu0 %v209
    %v254 = vpop.f32.mrb[0].mxu0
    %v255 = vadd.f32 %v185, %v254
    %v256 = vpop.f32.mrb[0].mxu0
    %v257 = vpop.f32.mrb[0].mxu0
    %v258 = vadd.f32 %v185, %v257
    %v259 = vpop.f32.mrb[0].mxu0
    %260 = vmatprep.mubr.bf16.mxu0 0
    %261 = vmatmul.mubr.bf16.gmra.mrb[0].mxu0 %v212
    %v262 = vpop.f32.mrb[0].mxu0
    %v263 = vadd.f32 %v185, %v262
    %v264 = vpop.f32.mrb[0].mxu0
    %v265 = vpop.f32.mrb[0].mxu0
    %v266 = vadd.f32 %v185, %v265
    %v267 = vpop.f32.mrb[0].mxu0
    %268 = vmatprep.mubr.bf16.mxu0 0
    %269 = vmatmul.mubr.bf16.gmra.mrb[0].mxu0 %v215
    %v270 = vpop.f32.mrb[0].mxu0
    %v271 = vadd.f32 %v185, %v270
    %v272 = vpop.f32.mrb[0].mxu0
    %v273 = vpop.f32.mrb[0].mxu0
    %v274 = vadd.f32 %v185, %v273
    %v275 = vpop.f32.mrb[0].mxu0
    %276 = vmatprep.mubr.bf16.mxu0 0
    %277 = vmatmul.mubr.bf16.gmra.mrb[0].mxu0 %v218
    %v278 = vpop.f32.mrb[0].mxu0
    %v279 = vadd.f32 %v185, %v278
    %v280 = vpop.f32.mrb[0].mxu0
    %v281 = vpop.f32.mrb[0].mxu0
    %v282 = vadd.f32 %v185, %v281
    %v283 = vpop.f32.mrb[0].mxu0
    %284 = vdwg.mxu0
    %v285 = vmax.f32 %v255, 0.0
    %v286 = vmax.f32 %v258, 0.0
    %v287 = vmax.f32 %v263, 0.0
    %v288 = vmax.f32 %v266, 0.0
    %v289 = vmax.f32 %v271, 0.0
    %v290 = vmax.f32 %v274, 0.0
    %v291 = vmax.f32 %v279, 0.0
    %v292 = vmax.f32 %v282, 0.0
    %v293 = vpack.c.bf16 %v286, %v285
    %v294 = vpack.c.bf16 %v288, %v287
    %v295 = vpack.c.bf16 %v290, %v289
    %v296 = vpack.c.bf16 %v292, %v291
    %v297 = vld [vmem:[%s5] sm:$0xf]
    %v298 = vld [vmem:[%s5 + $0x4] sm:$0xf]
    %v299 = vld [vmem:[%s5 + $0x8] sm:$0xf]
    %v300 = vld [vmem:[%s5 + $0xc] sm:$0xf]
    %v305 = vunpack.c.l.b16 %v297
    %v306 = vunpack.c.l.b16 %v298
    %v307 = vunpack.c.l.b16 %v299
    %v308 = vunpack.c.l.b16 %v300
    %v309 = vpack.c.b16 %v306, %v305
    %v310 = vpack.c.b16 %v308, %v307
    %v314 = vsel %vm99, %v293, 0
    %v317 = vsel %vm99, %v294, 0
    %v320 = vsel %vm99, %v295, 0
    %v323 = vsel %vm99, %v296, 0
    %325 = vmatprep.subr.bf16.mxu0 0
    %326 = vmatpush1.bf16.msra.mxu0 %v309
    %327 = vmatprep.subr.bf16.mxu0 0
    %328 = vmatpush1.bf16.msra.mxu0 %v310
    %329 = vmatprep.subr.bf16.mxu0 0
    %330 = vmatpush1.bf16.msra.mxu0 0
    %331 = vmatprep.subr.bf16.mxu0 0
    %332 = vmatpush1.bf16.msra.mxu0 0
    %333 = vmatprep.subr.bf16.mxu0 0
    %334 = vmatpush1.bf16.msra.mxu0 0
    %335 = vmatprep.subr.bf16.mxu0 0
    %336 = vmatpush1.bf16.msra.mxu0 0
    %337 = vmatprep.subr.bf16.mxu0 0
    %338 = vmatpush1.bf16.msra.mxu0 0
    %339 = vmatprep.subr.bf16.mxu0 0
    %340 = vmatpush1.bf16.msra.mxu0 0
    %341 = vmatprep.subr.bf16.mxu0 0
    %342 = vmatpush1.bf16.msra.mxu0 0
    %343 = vmatprep.subr.bf16.mxu0 0
    %344 = vmatpush1.bf16.msra.mxu0 0
    %345 = vmatprep.subr.bf16.mxu0 0
    %346 = vmatpush1.bf16.msra.mxu0 0
    %347 = vmatprep.subr.bf16.mxu0 0
    %348 = vmatpush1.bf16.msra.mxu0 0
    %349 = vmatprep.subr.bf16.mxu0 0
    %350 = vmatpush1.bf16.msra.mxu0 0
    %351 = vmatprep.subr.bf16.mxu0 0
    %352 = vmatpush1.bf16.msra.mxu0 0
    %353 = vmatprep.subr.bf16.mxu0 0
    %354 = vmatpush1.bf16.msra.mxu0 0
    %355 = vmatprep.subr.bf16.mxu0 0
    %356 = vmatpush1.bf16.msra.mxu0 0
    %357 = vmatprep.mubr.bf16.mxu0 0
    %358 = vmatmul.mubr.bf16.gmra.mrb[0].mxu0 %v314
    %v359 = vpop.f32.mrb[0].mxu0
    %v360 = vadd.f32 0.0, %v359
    %v361 = vpop.f32.mrb[0].mxu0
    %v362 = vpop.f32.mrb[0].mxu0
    %v363 = vadd.f32 0.0, %v362
    %v364 = vpop.f32.mrb[0].mxu0
    %365 = vmatprep.mubr.bf16.mxu0 0
    %366 = vmatmul.mubr.bf16.gmra.mrb[0].mxu0 %v317
    %v367 = vpop.f32.mrb[0].mxu0
    %v368 = vadd.f32 0.0, %v367
    %v369 = vpop.f32.mrb[0].mxu0
    %v370 = vpop.f32.mrb[0].mxu0
    %v371 = vadd.f32 0.0, %v370
    %v372 = vpop.f32.mrb[0].mxu0
    %373 = vmatprep.mubr.bf16.mxu0 0
    %374 = vmatmul.mubr.bf16.gmra.mrb[0].mxu0 %v320
    %v375 = vpop.f32.mrb[0].mxu0
    %v376 = vadd.f32 0.0, %v375
    %v377 = vpop.f32.mrb[0].mxu0
    %v378 = vpop.f32.mrb[0].mxu0
    %v379 = vadd.f32 0.0, %v378
    %v380 = vpop.f32.mrb[0].mxu0
    %381 = vmatprep.mubr.bf16.mxu0 0
    %382 = vmatmul.mubr.bf16.gmra.mrb[0].mxu0 %v323
    %v383 = vpop.f32.mrb[0].mxu0
    %v384 = vadd.f32 0.0, %v383
    %v385 = vpop.f32.mrb[0].mxu0
    %v386 = vpop.f32.mrb[0].mxu0
    %v387 = vadd.f32 0.0, %v386
    %v388 = vpop.f32.mrb[0].mxu0
    %389 = vdwg.mxu0
    %v390 = vpack.c.bf16 %v363, %v360
    %v391 = vpack.c.bf16 %v371, %v368
    %v392 = vpack.c.bf16 %v379, %v376
    %v393 = vpack.c.bf16 %v387, %v384
    %v395 = vlaneseq
    %v396 = vshrl.u32 %v395, 7
    %v397 = vsub.s32 0, %v396
    %v398 = vrot.slane %v53, %v397
    %400 = vmatprep.subr.bf16.mxu0 0
    %401 = vmatpush1.bf16.msra.mxu0 %v390
    %402 = vmatprep.subr.bf16.mxu0 0
    %403 = vmatpush1.bf16.msra.mxu0 %v391
    %404 = vmatprep.subr.bf16.mxu0 0
    %405 = vmatpush1.bf16.msra.mxu0 %v392
    %406 = vmatprep.subr.bf16.mxu0 0
    %407 = vmatpush1.bf16.msra.mxu0 %v393
    %408 = vmatprep.subr.bf16.mxu0 0
    %409 = vmatpush1.bf16.msra.mxu0 0
    %410 = vmatprep.subr.bf16.mxu0 0
    %411 = vmatpush1.bf16.msra.mxu0 0
    %412 = vmatprep.subr.bf16.mxu0 0
    %413 = vmatpush1.bf16.msra.mxu0 0
    %414 = vmatprep.subr.bf16.mxu0 0
    %415 = vmatpush1.bf16.msra.mxu0 0
    %416 = vmatprep.subr.bf16.mxu0 0
    %417 = vmatpush1.bf16.msra.mxu0 0
    %418 = vmatprep.subr.bf16.mxu0 0
    %419 = vmatpush1.bf16.msra.mxu0 0
    %420 = vmatprep.subr.bf16.mxu0 0
    %421 = vmatpush1.bf16.msra.mxu0 0
    %422 = vmatprep.subr.bf16.mxu0 0
    %423 = vmatpush1.bf16.msra.mxu0 0
    %424 = vmatprep.subr.bf16.mxu0 0
    %425 = vmatpush1.bf16.msra.mxu0 0
    %426 = vmatprep.subr.bf16.mxu0 0
    %427 = vmatpush1.bf16.msra.mxu0 0
    %428 = vmatprep.subr.bf16.mxu0 0
    %429 = vmatpush1.bf16.msra.mxu0 0
    %430 = vmatprep.subr.bf16.mxu0 0
    %431 = vmatpush1.bf16.msra.mxu0 0
    %432 = vmatprep.mubr.bf16.mxu0 0
    %433 = vmatmul.mubr.bf16.gmra.mrb[0].mxu0 %v209
    %v434 = vpop.f32.mrb[0].mxu0
    %v435 = vadd.f32 %v398, %v434
    %v436 = vpop.f32.mrb[0].mxu0
    %v437 = vpop.f32.mrb[0].mxu0
    %v438 = vadd.f32 %v398, %v437
    %v439 = vpop.f32.mrb[0].mxu0
    %440 = vmatprep.mubr.bf16.mxu0 0
    %441 = vmatmul.mubr.bf16.gmra.mrb[0].mxu0 %v212
    %v442 = vpop.f32.mrb[0].mxu0
    %v443 = vadd.f32 %v398, %v442
    %v444 = vpop.f32.mrb[0].mxu0
    %v445 = vpop.f32.mrb[0].mxu0
    %v446 = vadd.f32 %v398, %v445
    %v447 = vpop.f32.mrb[0].mxu0
    %448 = vmatprep.mubr.bf16.mxu0 0
    %449 = vmatmul.mubr.bf16.gmra.mrb[0].mxu0 %v215
    %v450 = vpop.f32.mrb[0].mxu0
    %v451 = vadd.f32 %v398, %v450
    %v452 = vpop.f32.mrb[0].mxu0
    %v453 = vpop.f32.mrb[0].mxu0
    %v454 = vadd.f32 %v398, %v453
    %v455 = vpop.f32.mrb[0].mxu0
    %456 = vmatprep.mubr.bf16.mxu0 0
    %457 = vmatmul.mubr.bf16.gmra.mrb[0].mxu0 %v218
    %v458 = vpop.f32.mrb[0].mxu0
    %v459 = vadd.f32 %v398, %v458
    %v460 = vpop.f32.mrb[0].mxu0
    %v461 = vpop.f32.mrb[0].mxu0
    %v462 = vadd.f32 %v398, %v461
    %v463 = vpop.f32.mrb[0].mxu0
    %464 = vdwg.mxu0
    %v465 = vmax.f32 %v435, 0.0
    %v466 = vmax.f32 %v438, 0.0
    %v467 = vmax.f32 %v443, 0.0
    %v468 = vmax.f32 %v446, 0.0
    %v469 = vmax.f32 %v451, 0.0
    %v470 = vmax.f32 %v454, 0.0
    %v471 = vmax.f32 %v459, 0.0
    %v472 = vmax.f32 %v462, 0.0
    %v481 = vunpack.c.l.b16 %v44
    %v482 = vunpack.c.l.b16 %v45
    %v483 = vunpack.c.l.b16 %v46
    %v484 = vunpack.c.l.b16 %v47
    %v485 = vunpack.c.l.b16 %v48
    %v486 = vunpack.c.l.b16 %v49
    %v487 = vunpack.c.l.b16 %v50
    %v488 = vunpack.c.l.b16 %v51
    %v489 = vpack.c.b16 %v482, %v481
    %v490 = vpack.c.b16 %v484, %v483
    %v491 = vpack.c.b16 %v486, %v485
    %v492 = vpack.c.b16 %v488, %v487
    %v494 = vsel %vm207, %v489, 0
    %v497 = vsel %vm207, %v490, 0
    %v500 = vsel %vm207, %v491, 0
    %v503 = vsel %vm207, %v492, 0
    %505 = vmatprep.subr.bf16.mxu0 0
    %506 = vmatpush1.bf16.msra.mxu0 %v293
    %507 = vmatprep.subr.bf16.mxu0 0
    %508 = vmatpush1.bf16.msra.mxu0 %v294
    %509 = vmatprep.subr.bf16.mxu0 0
    %510 = vmatpush1.bf16.msra.mxu0 %v295
    %511 = vmatprep.subr.bf16.mxu0 0
    %512 = vmatpush1.bf16.msra.mxu0 %v296
    %513 = vmatprep.subr.bf16.mxu0 0
    %514 = vmatpush1.bf16.msra.mxu0 0
    %515 = vmatprep.subr.bf16.mxu0 0
    %516 = vmatpush1.bf16.msra.mxu0 0
    %517 = vmatprep.subr.bf16.mxu0 0
    %518 = vmatpush1.bf16.msra.mxu0 0
    %519 = vmatprep.subr.bf16.mxu0 0
    %520 = vmatpush1.bf16.msra.mxu0 0
    %521 = vmatprep.subr.bf16.mxu0 0
    %522 = vmatpush1.bf16.msra.mxu0 0
    %523 = vmatprep.subr.bf16.mxu0 0
    %524 = vmatpush1.bf16.msra.mxu0 0
    %525 = vmatprep.subr.bf16.mxu0 0
    %526 = vmatpush1.bf16.msra.mxu0 0
    %527 = vmatprep.subr.bf16.mxu0 0
    %528 = vmatpush1.bf16.msra.mxu0 0
    %529 = vmatprep.subr.bf16.mxu0 0
    %530 = vmatpush1.bf16.msra.mxu0 0
    %531 = vmatprep.subr.bf16.mxu0 0
    %532 = vmatpush1.bf16.msra.mxu0 0
    %533 = vmatprep.subr.bf16.mxu0 0
    %534 = vmatpush1.bf16.msra.mxu0 0
    %535 = vmatprep.subr.bf16.mxu0 0
    %536 = vmatpush1.bf16.msra.mxu0 0
    %537 = vmatprep.mubr.bf16.mxu0 0
    %538 = vmatmul.mubr.bf16.gmra.mrb[0].mxu0 %v494
    %v539 = vpop.f32.mrb[0].mxu0
    %v540 = vadd.f32 0.0, %v539
    %v541 = vpop.f32.mrb[0].mxu0
    %v542 = vpop.f32.mrb[0].mxu0
    %v543 = vadd.f32 0.0, %v542
    %v544 = vpop.f32.mrb[0].mxu0
    %545 = vmatprep.mubr.bf16.mxu0 0
    %546 = vmatmul.mubr.bf16.gmra.mrb[0].mxu0 %v497
    %v547 = vpop.f32.mrb[0].mxu0
    %v548 = vadd.f32 0.0, %v547
    %v549 = vpop.f32.mrb[0].mxu0
    %v550 = vpop.f32.mrb[0].mxu0
    %v551 = vadd.f32 0.0, %v550
    %v552 = vpop.f32.mrb[0].mxu0
    %553 = vmatprep.mubr.bf16.mxu0 0
    %554 = vmatmul.mubr.bf16.gmra.mrb[0].mxu0 %v500
    %v555 = vpop.f32.mrb[0].mxu0
    %v556 = vadd.f32 0.0, %v555
    %v557 = vpop.f32.mrb[0].mxu0
    %v558 = vpop.f32.mrb[0].mxu0
    %v559 = vadd.f32 0.0, %v558
    %v560 = vpop.f32.mrb[0].mxu0
    %561 = vmatprep.mubr.bf16.mxu0 0
    %562 = vmatmul.mubr.bf16.gmra.mrb[0].mxu0 %v503
    %v563 = vpop.f32.mrb[0].mxu0
    %v564 = vadd.f32 0.0, %v563
    %v565 = vpop.f32.mrb[0].mxu0
    %v566 = vpop.f32.mrb[0].mxu0
    %v567 = vadd.f32 0.0, %v566
    %v568 = vpop.f32.mrb[0].mxu0
    %569 = vdwg.mxu0
    %v570 = vmul.f32 %v540, %v540
    %v571 = vmul.f32 %v543, %v543
    %v572 = vmul.f32 %v548, %v548
    %v573 = vmul.f32 %v551, %v551
    %v574 = vmul.f32 %v556, %v556
    %v575 = vmul.f32 %v559, %v559
    %v576 = vmul.f32 %v564, %v564
    %v577 = vmul.f32 %v567, %v567
    %v578 = vsel %vm99, %v570, 0.0
    %579 = vadd.xlane.f32.xlu0 %v578
    %v580 = vpop.xlane.xlu0 %579
    %v581 = vsel %vm99, %v571, 0.0
    %582 = vadd.xlane.f32.xlu0 %v581
    %v583 = vpop.xlane.xlu0 %582
    %v584 = vsel %vm99, %v572, 0.0
    %585 = vadd.xlane.f32.xlu0 %v584
    %v586 = vpop.xlane.xlu0 %585
    %v587 = vsel %vm99, %v573, 0.0
    %588 = vadd.xlane.f32.xlu0 %v587
    %v589 = vpop.xlane.xlu0 %588
    %v590 = vsel %vm99, %v574, 0.0
    %591 = vadd.xlane.f32.xlu0 %v590
    %v592 = vpop.xlane.xlu0 %591
    %v593 = vsel %vm99, %v575, 0.0
    %594 = vadd.xlane.f32.xlu0 %v593
    %v595 = vpop.xlane.xlu0 %594
    %v596 = vsel %vm99, %v576, 0.0
    %597 = vadd.xlane.f32.xlu0 %v596
    %v598 = vpop.xlane.xlu0 %597
    %v599 = vsel %vm99, %v577, 0.0
    %600 = vadd.xlane.f32.xlu0 %v599
    %v601 = vpop.xlane.xlu0 %600
    %v602 = vmax.f32 %v580, 1e-24
    %v603 = vmax.f32 %v583, 1e-24
    %v604 = vmax.f32 %v586, 1e-24
    %v605 = vmax.f32 %v589, 1e-24
    %v606 = vmax.f32 %v592, 1e-24
    %v607 = vmax.f32 %v595, 1e-24
    %v608 = vmax.f32 %v598, 1e-24
    %v609 = vmax.f32 %v601, 1e-24
    %v610 = vrsqrt.pop %v602
    %v611 = vrsqrt.pop %v603
    %v612 = vrsqrt.pop %v604
    %v613 = vrsqrt.pop %v605
    %v614 = vrsqrt.pop %v606
    %v615 = vrsqrt.pop %v607
    %v616 = vrsqrt.pop %v608
    %v617 = vrsqrt.pop %v609
    %v618 = vmul.f32 %v540, %v610
    %v619 = vmul.f32 %v543, %v611
    %v620 = vmul.f32 %v548, %v612
    %v621 = vmul.f32 %v551, %v613
    %v622 = vmul.f32 %v556, %v614
    %v623 = vmul.f32 %v559, %v615
    %v624 = vmul.f32 %v564, %v616
    %v625 = vmul.f32 %v567, %v617
    %v626 = vxor.u32 %v618, 2147483648
    %v627 = vxor.u32 %v619, 2147483648
    %v628 = vxor.u32 %v620, 2147483648
    %v629 = vxor.u32 %v621, 2147483648
    %v630 = vxor.u32 %v622, 2147483648
    %v631 = vxor.u32 %v623, 2147483648
    %v632 = vxor.u32 %v624, 2147483648
    %v633 = vxor.u32 %v625, 2147483648
    %v634 = vmul.f32 %v626, 1.442695
    %v635 = vpow.pop %v634
    %v636 = vmul.f32 %v627, 1.442695
    %v637 = vpow.pop %v636
    %v638 = vmul.f32 %v628, 1.442695
    %v639 = vpow.pop %v638
    %v640 = vmul.f32 %v629, 1.442695
    %v641 = vpow.pop %v640
    %v642 = vmul.f32 %v630, 1.442695
    %v643 = vpow.pop %v642
    %v644 = vmul.f32 %v631, 1.442695
    %v645 = vpow.pop %v644
    %v646 = vmul.f32 %v632, 1.442695
    %v647 = vpow.pop %v646
    %v648 = vmul.f32 %v633, 1.442695
    %v649 = vpow.pop %v648
    %v650 = vadd.f32 %v635, 1.0
    %v651 = vadd.f32 %v637, 1.0
    %v652 = vadd.f32 %v639, 1.0
    %v653 = vadd.f32 %v641, 1.0
    %v654 = vadd.f32 %v643, 1.0
    %v655 = vadd.f32 %v645, 1.0
    %v656 = vadd.f32 %v647, 1.0
    %v657 = vadd.f32 %v649, 1.0
    %v658 = vrcp.pop %v650
    %v659 = vmul.f32 1.0, %v658
    %v660 = vrcp.pop %v651
    %v661 = vmul.f32 1.0, %v660
    %v662 = vrcp.pop %v652
    %v663 = vmul.f32 1.0, %v662
    %v664 = vrcp.pop %v653
    %v665 = vmul.f32 1.0, %v664
    %v666 = vrcp.pop %v654
    %v667 = vmul.f32 1.0, %v666
    %v668 = vrcp.pop %v655
    %v669 = vmul.f32 1.0, %v668
    %v670 = vrcp.pop %v656
    %v671 = vmul.f32 1.0, %v670
    %v672 = vrcp.pop %v657
    %v673 = vmul.f32 1.0, %v672
    %682 = vrot.lane.b32.xlu0 %v570, 96
    %v683 = vpop.permute.xlu0 %682
    %684 = vrot.lane.b32.xlu0 %v571, 96
    %v685 = vpop.permute.xlu0 %684
    %686 = vrot.lane.b32.xlu0 %v572, 96
    %v687 = vpop.permute.xlu0 %686
    %688 = vrot.lane.b32.xlu0 %v573, 96
    %v689 = vpop.permute.xlu0 %688
    %690 = vrot.lane.b32.xlu0 %v574, 96
    %v691 = vpop.permute.xlu0 %690
    %692 = vrot.lane.b32.xlu0 %v575, 96
    %v693 = vpop.permute.xlu0 %692
    %694 = vrot.lane.b32.xlu0 %v576, 96
    %v695 = vpop.permute.xlu0 %694
    %696 = vrot.lane.b32.xlu0 %v577, 96
    %v697 = vpop.permute.xlu0 %696
    %v706 = vsel %vm99, %v683, 0.0
    %707 = vadd.xlane.f32.xlu0 %v706
    %v708 = vpop.xlane.xlu0 %707
    %v709 = vsel %vm99, %v685, 0.0
    %710 = vadd.xlane.f32.xlu0 %v709
    %v711 = vpop.xlane.xlu0 %710
    %v712 = vsel %vm99, %v687, 0.0
    %713 = vadd.xlane.f32.xlu0 %v712
    %v714 = vpop.xlane.xlu0 %713
    %v715 = vsel %vm99, %v689, 0.0
    %716 = vadd.xlane.f32.xlu0 %v715
    %v717 = vpop.xlane.xlu0 %716
    %v718 = vsel %vm99, %v691, 0.0
    %719 = vadd.xlane.f32.xlu0 %v718
    %v720 = vpop.xlane.xlu0 %719
    %v721 = vsel %vm99, %v693, 0.0
    %722 = vadd.xlane.f32.xlu0 %v721
    %v723 = vpop.xlane.xlu0 %722
    %v724 = vsel %vm99, %v695, 0.0
    %725 = vadd.xlane.f32.xlu0 %v724
    %v726 = vpop.xlane.xlu0 %725
    %v727 = vsel %vm99, %v697, 0.0
    %728 = vadd.xlane.f32.xlu0 %v727
    %v729 = vpop.xlane.xlu0 %728
    %v730 = vmax.f32 %v708, 1e-24
    %v731 = vmax.f32 %v711, 1e-24
    %v732 = vmax.f32 %v714, 1e-24
    %v733 = vmax.f32 %v717, 1e-24
    %v734 = vmax.f32 %v720, 1e-24
    %v735 = vmax.f32 %v723, 1e-24
    %v736 = vmax.f32 %v726, 1e-24
    %v737 = vmax.f32 %v729, 1e-24
    %v738 = vrsqrt.pop %v730
    %v739 = vrsqrt.pop %v731
    %v740 = vrsqrt.pop %v732
    %v741 = vrsqrt.pop %v733
    %v742 = vrsqrt.pop %v734
    %v743 = vrsqrt.pop %v735
    %v744 = vrsqrt.pop %v736
    %v745 = vrsqrt.pop %v737
    %v746 = vmul.f32 %v540, %v738
    %v747 = vmul.f32 %v543, %v739
    %v748 = vmul.f32 %v548, %v740
    %v749 = vmul.f32 %v551, %v741
    %v750 = vmul.f32 %v556, %v742
    %v751 = vmul.f32 %v559, %v743
    %v752 = vmul.f32 %v564, %v744
    %v753 = vmul.f32 %v567, %v745
    %v754 = vxor.u32 %v746, 2147483648
    %v755 = vxor.u32 %v747, 2147483648
    %v756 = vxor.u32 %v748, 2147483648
    %v757 = vxor.u32 %v749, 2147483648
    %v758 = vxor.u32 %v750, 2147483648
    %v759 = vxor.u32 %v751, 2147483648
    %v760 = vxor.u32 %v752, 2147483648
    %v761 = vxor.u32 %v753, 2147483648
    %v762 = vmul.f32 %v754, 1.442695
    %v763 = vpow.pop %v762
    %v764 = vmul.f32 %v755, 1.442695
    %v765 = vpow.pop %v764
    %v766 = vmul.f32 %v756, 1.442695
    %v767 = vpow.pop %v766
    %v768 = vmul.f32 %v757, 1.442695
    %v769 = vpow.pop %v768
    %v770 = vmul.f32 %v758, 1.442695
    %v771 = vpow.pop %v770
    %v772 = vmul.f32 %v759, 1.442695
    %v773 = vpow.pop %v772
    %v774 = vmul.f32 %v760, 1.442695
    %v775 = vpow.pop %v774
    %v776 = vmul.f32 %v761, 1.442695
    %v777 = vpow.pop %v776
    %v778 = vadd.f32 %v763, 1.0
    %v779 = vadd.f32 %v765, 1.0
    %v780 = vadd.f32 %v767, 1.0
    %v781 = vadd.f32 %v769, 1.0
    %v782 = vadd.f32 %v771, 1.0
    %v783 = vadd.f32 %v773, 1.0
    %v784 = vadd.f32 %v775, 1.0
    %v785 = vadd.f32 %v777, 1.0
    %v786 = vrcp.pop %v778
    %v787 = vmul.f32 1.0, %v786
    %v788 = vrcp.pop %v779
    %v789 = vmul.f32 1.0, %v788
    %v790 = vrcp.pop %v780
    %v791 = vmul.f32 1.0, %v790
    %v792 = vrcp.pop %v781
    %v793 = vmul.f32 1.0, %v792
    %v794 = vrcp.pop %v782
    %v795 = vmul.f32 1.0, %v794
    %v796 = vrcp.pop %v783
    %v797 = vmul.f32 1.0, %v796
    %v798 = vrcp.pop %v784
    %v799 = vmul.f32 1.0, %v798
    %v800 = vrcp.pop %v785
    %v801 = vmul.f32 1.0, %v800
    %810 = vrot.lane.b32.xlu0 %v787, 96
    %v811 = vpop.permute.xlu0 %810
    %812 = vrot.lane.b32.xlu0 %v789, 96
    %v813 = vpop.permute.xlu0 %812
    %814 = vrot.lane.b32.xlu0 %v791, 96
    %v815 = vpop.permute.xlu0 %814
    %816 = vrot.lane.b32.xlu0 %v793, 96
    %v817 = vpop.permute.xlu0 %816
    %818 = vrot.lane.b32.xlu0 %v795, 96
    %v819 = vpop.permute.xlu0 %818
    %820 = vrot.lane.b32.xlu0 %v797, 96
    %v821 = vpop.permute.xlu0 %820
    %822 = vrot.lane.b32.xlu0 %v799, 96
    %v823 = vpop.permute.xlu0 %822
    %824 = vrot.lane.b32.xlu0 %v801, 96
    %v825 = vpop.permute.xlu0 %824
    %v834 = vpack.c.bf16 %v661, %v659
    %v835 = vpack.c.bf16 %v665, %v663
    %v836 = vpack.c.bf16 %v669, %v667
    %v837 = vpack.c.bf16 %v673, %v671
    %v838 = vpack.c.bf16 %v813, %v811
    %v839 = vpack.c.bf16 %v817, %v815
    %v840 = vpack.c.bf16 %v821, %v819
    %v841 = vpack.c.bf16 %v825, %v823
    %v842 = vld [vmem:[%s7] sm:$0xf]
    %v843 = vld [vmem:[%s7 + $0x4] sm:$0xf]
    %v844 = vld [vmem:[%s7 + $0x8] sm:$0xf]
    %v845 = vld [vmem:[%s7 + $0xc] sm:$0xf]
    %v850 = vunpack.c.l.b16 %v842
    %v851 = vunpack.c.l.b16 %v843
    %v852 = vunpack.c.l.b16 %v844
    %v853 = vunpack.c.l.b16 %v845
    %v854 = vpack.c.b16 %v851, %v850
    %v855 = vpack.c.b16 %v853, %v852
    %v859 = vsel %vm99, %v834, 0
    %v862 = vsel %vm99, %v835, 0
    %v865 = vsel %vm99, %v836, 0
    %v868 = vsel %vm99, %v837, 0
    %v871 = vsel %vm99, %v838, 0
    %v874 = vsel %vm99, %v839, 0
    %v877 = vsel %vm99, %v840, 0
    %v880 = vsel %vm99, %v841, 0
    %882 = vmatprep.subr.bf16.mxu0 0
    %883 = vmatpush1.bf16.msra.mxu0 %v854
    %884 = vmatprep.subr.bf16.mxu0 0
    %885 = vmatpush1.bf16.msra.mxu0 %v855
    %886 = vmatprep.subr.bf16.mxu0 0
    %887 = vmatpush1.bf16.msra.mxu0 0
    %888 = vmatprep.subr.bf16.mxu0 0
    %889 = vmatpush1.bf16.msra.mxu0 0
    %890 = vmatprep.subr.bf16.mxu0 0
    %891 = vmatpush1.bf16.msra.mxu0 0
    %892 = vmatprep.subr.bf16.mxu0 0
    %893 = vmatpush1.bf16.msra.mxu0 0
    %894 = vmatprep.subr.bf16.mxu0 0
    %895 = vmatpush1.bf16.msra.mxu0 0
    %896 = vmatprep.subr.bf16.mxu0 0
    %897 = vmatpush1.bf16.msra.mxu0 0
    %898 = vmatprep.subr.bf16.mxu0 0
    %899 = vmatpush1.bf16.msra.mxu0 0
    %900 = vmatprep.subr.bf16.mxu0 0
    %901 = vmatpush1.bf16.msra.mxu0 0
    %902 = vmatprep.subr.bf16.mxu0 0
    %903 = vmatpush1.bf16.msra.mxu0 0
    %904 = vmatprep.subr.bf16.mxu0 0
    %905 = vmatpush1.bf16.msra.mxu0 0
    %906 = vmatprep.subr.bf16.mxu0 0
    %907 = vmatpush1.bf16.msra.mxu0 0
    %908 = vmatprep.subr.bf16.mxu0 0
    %909 = vmatpush1.bf16.msra.mxu0 0
    %910 = vmatprep.subr.bf16.mxu0 0
    %911 = vmatpush1.bf16.msra.mxu0 0
    %912 = vmatprep.subr.bf16.mxu0 0
    %913 = vmatpush1.bf16.msra.mxu0 0
    %914 = vmatprep.mubr.bf16.mxu0 0
    %915 = vmatmul.mubr.bf16.gmra.mrb[0].mxu0 %v859
    %v916 = vpop.f32.mrb[0].mxu0
    %v917 = vadd.f32 0.0, %v916
    %v918 = vpop.f32.mrb[0].mxu0
    %v919 = vpop.f32.mrb[0].mxu0
    %v920 = vadd.f32 0.0, %v919
    %v921 = vpop.f32.mrb[0].mxu0
    %922 = vmatprep.mubr.bf16.mxu0 0
    %923 = vmatmul.mubr.bf16.gmra.mrb[0].mxu0 %v862
    %v924 = vpop.f32.mrb[0].mxu0
    %v925 = vadd.f32 0.0, %v924
    %v926 = vpop.f32.mrb[0].mxu0
    %v927 = vpop.f32.mrb[0].mxu0
    %v928 = vadd.f32 0.0, %v927
    %v929 = vpop.f32.mrb[0].mxu0
    %930 = vmatprep.mubr.bf16.mxu0 0
    %931 = vmatmul.mubr.bf16.gmra.mrb[0].mxu0 %v865
    %v932 = vpop.f32.mrb[0].mxu0
    %v933 = vadd.f32 0.0, %v932
    %v934 = vpop.f32.mrb[0].mxu0
    %v935 = vpop.f32.mrb[0].mxu0
    %v936 = vadd.f32 0.0, %v935
    %v937 = vpop.f32.mrb[0].mxu0
    %938 = vmatprep.mubr.bf16.mxu0 0
    %939 = vmatmul.mubr.bf16.gmra.mrb[0].mxu0 %v868
    %v940 = vpop.f32.mrb[0].mxu0
    %v941 = vadd.f32 0.0, %v940
    %v942 = vpop.f32.mrb[0].mxu0
    %v943 = vpop.f32.mrb[0].mxu0
    %v944 = vadd.f32 0.0, %v943
    %v945 = vpop.f32.mrb[0].mxu0
    %946 = vmatprep.mubr.bf16.mxu0 0
    %947 = vmatmul.mubr.bf16.gmra.mrb[0].mxu0 %v871
    %v948 = vpop.f32.mrb[0].mxu0
    %v949 = vadd.f32 0.0, %v948
    %v950 = vpop.f32.mrb[0].mxu0
    %v951 = vpop.f32.mrb[0].mxu0
    %v952 = vadd.f32 0.0, %v951
    %v953 = vpop.f32.mrb[0].mxu0
    %954 = vmatprep.mubr.bf16.mxu0 0
    %955 = vmatmul.mubr.bf16.gmra.mrb[0].mxu0 %v874
    %v956 = vpop.f32.mrb[0].mxu0
    %v957 = vadd.f32 0.0, %v956
    %v958 = vpop.f32.mrb[0].mxu0
    %v959 = vpop.f32.mrb[0].mxu0
    %v960 = vadd.f32 0.0, %v959
    %v961 = vpop.f32.mrb[0].mxu0
    %962 = vmatprep.mubr.bf16.mxu0 0
    %963 = vmatmul.mubr.bf16.gmra.mrb[0].mxu0 %v877
    %v964 = vpop.f32.mrb[0].mxu0
    %v965 = vadd.f32 0.0, %v964
    %v966 = vpop.f32.mrb[0].mxu0
    %v967 = vpop.f32.mrb[0].mxu0
    %v968 = vadd.f32 0.0, %v967
    %v969 = vpop.f32.mrb[0].mxu0
    %970 = vmatprep.mubr.bf16.mxu0 0
    %971 = vmatmul.mubr.bf16.gmra.mrb[0].mxu0 %v880
    %v972 = vpop.f32.mrb[0].mxu0
    %v973 = vadd.f32 0.0, %v972
    %v974 = vpop.f32.mrb[0].mxu0
    %v975 = vpop.f32.mrb[0].mxu0
    %v976 = vadd.f32 0.0, %v975
    %v977 = vpop.f32.mrb[0].mxu0
    %978 = vdwg.mxu0
    %v979 = vmul.f32 %v285, %v917
    %v980 = vmul.f32 %v286, %v920
    %v981 = vmul.f32 %v287, %v925
    %v982 = vmul.f32 %v288, %v928
    %v983 = vmul.f32 %v289, %v933
    %v984 = vmul.f32 %v290, %v936
    %v985 = vmul.f32 %v291, %v941
    %v986 = vmul.f32 %v292, %v944
    %v987 = vsel %vm99, %v979, 0.0
    %988 = vadd.xlane.f32.xlu0 %v987
    %v989 = vpop.xlane.xlu0 %988
    %v990 = vsel %vm99, %v980, 0.0
    %991 = vadd.xlane.f32.xlu0 %v990
    %v992 = vpop.xlane.xlu0 %991
    %v993 = vsel %vm99, %v981, 0.0
    %994 = vadd.xlane.f32.xlu0 %v993
    %v995 = vpop.xlane.xlu0 %994
    %v996 = vsel %vm99, %v982, 0.0
    %997 = vadd.xlane.f32.xlu0 %v996
    %v998 = vpop.xlane.xlu0 %997
    %v999 = vsel %vm99, %v983, 0.0
    %1000 = vadd.xlane.f32.xlu0 %v999
    %v1001 = vpop.xlane.xlu0 %1000
    %v1002 = vsel %vm99, %v984, 0.0
    %1003 = vadd.xlane.f32.xlu0 %v1002
    %v1004 = vpop.xlane.xlu0 %1003
    %v1005 = vsel %vm99, %v985, 0.0
    %1006 = vadd.xlane.f32.xlu0 %v1005
    %v1007 = vpop.xlane.xlu0 %1006
    %v1008 = vsel %vm99, %v986, 0.0
    %1009 = vadd.xlane.f32.xlu0 %v1008
    %v1010 = vpop.xlane.xlu0 %1009
    %v1012 = vlaneseq
    %v1013 = vshrl.u32 %v1012, 7
    %v1014 = vsub.s32 0, %v1013
    %v1015 = vrot.slane %v54, %v1014
    %v1017 = vadd.f32 %v989, %v1015
    %v1018 = vadd.f32 %v992, %v1015
    %v1019 = vadd.f32 %v995, %v1015
    %v1020 = vadd.f32 %v998, %v1015
    %v1021 = vadd.f32 %v1001, %v1015
    %v1022 = vadd.f32 %v1004, %v1015
    %v1023 = vadd.f32 %v1007, %v1015
    %v1024 = vadd.f32 %v1010, %v1015
    %1033 = vrot.lane.b32.xlu0 %v917, 32
    %v1034 = vpop.permute.xlu0 %1033
    %1035 = vrot.lane.b32.xlu0 %v920, 32
    %v1036 = vpop.permute.xlu0 %1035
    %1037 = vrot.lane.b32.xlu0 %v925, 32
    %v1038 = vpop.permute.xlu0 %1037
    %1039 = vrot.lane.b32.xlu0 %v928, 32
    %v1040 = vpop.permute.xlu0 %1039
    %1041 = vrot.lane.b32.xlu0 %v933, 32
    %v1042 = vpop.permute.xlu0 %1041
    %1043 = vrot.lane.b32.xlu0 %v936, 32
    %v1044 = vpop.permute.xlu0 %1043
    %1045 = vrot.lane.b32.xlu0 %v941, 32
    %v1046 = vpop.permute.xlu0 %1045
    %1047 = vrot.lane.b32.xlu0 %v944, 32
    %v1048 = vpop.permute.xlu0 %1047
    %v1057 = vmul.f32 %v285, %v1034
    %v1058 = vmul.f32 %v286, %v1036
    %v1059 = vmul.f32 %v287, %v1038
    %v1060 = vmul.f32 %v288, %v1040
    %v1061 = vmul.f32 %v289, %v1042
    %v1062 = vmul.f32 %v290, %v1044
    %v1063 = vmul.f32 %v291, %v1046
    %v1064 = vmul.f32 %v292, %v1048
    %1073 = vrot.lane.b32.xlu0 %v1057, 96
    %v1074 = vpop.permute.xlu0 %1073
    %1075 = vrot.lane.b32.xlu0 %v1058, 96
    %v1076 = vpop.permute.xlu0 %1075
    %1077 = vrot.lane.b32.xlu0 %v1059, 96
    %v1078 = vpop.permute.xlu0 %1077
    %1079 = vrot.lane.b32.xlu0 %v1060, 96
    %v1080 = vpop.permute.xlu0 %1079
    %1081 = vrot.lane.b32.xlu0 %v1061, 96
    %v1082 = vpop.permute.xlu0 %1081
    %1083 = vrot.lane.b32.xlu0 %v1062, 96
    %v1084 = vpop.permute.xlu0 %1083
    %1085 = vrot.lane.b32.xlu0 %v1063, 96
    %v1086 = vpop.permute.xlu0 %1085
    %1087 = vrot.lane.b32.xlu0 %v1064, 96
    %v1088 = vpop.permute.xlu0 %1087
    %v1097 = vsel %vm99, %v1074, 0.0
    %1098 = vadd.xlane.f32.xlu0 %v1097
    %v1099 = vpop.xlane.xlu0 %1098
    %v1100 = vsel %vm99, %v1076, 0.0
    %1101 = vadd.xlane.f32.xlu0 %v1100
    %v1102 = vpop.xlane.xlu0 %1101
    %v1103 = vsel %vm99, %v1078, 0.0
    %1104 = vadd.xlane.f32.xlu0 %v1103
    %v1105 = vpop.xlane.xlu0 %1104
    %v1106 = vsel %vm99, %v1080, 0.0
    %1107 = vadd.xlane.f32.xlu0 %v1106
    %v1108 = vpop.xlane.xlu0 %1107
    %v1109 = vsel %vm99, %v1082, 0.0
    %1110 = vadd.xlane.f32.xlu0 %v1109
    %v1111 = vpop.xlane.xlu0 %1110
    %v1112 = vsel %vm99, %v1084, 0.0
    %1113 = vadd.xlane.f32.xlu0 %v1112
    %v1114 = vpop.xlane.xlu0 %1113
    %v1115 = vsel %vm99, %v1086, 0.0
    %1116 = vadd.xlane.f32.xlu0 %v1115
    %v1117 = vpop.xlane.xlu0 %1116
    %v1118 = vsel %vm99, %v1088, 0.0
    %1119 = vadd.xlane.f32.xlu0 %v1118
    %v1120 = vpop.xlane.xlu0 %1119
    %v1121 = vadd.f32 %v1099, %v1015
    %v1122 = vadd.f32 %v1102, %v1015
    %v1123 = vadd.f32 %v1105, %v1015
    %v1124 = vadd.f32 %v1108, %v1015
    %v1125 = vadd.f32 %v1111, %v1015
    %v1126 = vadd.f32 %v1114, %v1015
    %v1127 = vadd.f32 %v1117, %v1015
    %v1128 = vadd.f32 %v1120, %v1015
    %1137 = vrot.lane.b32.xlu0 %v949, 32
    %v1138 = vpop.permute.xlu0 %1137
    %1139 = vrot.lane.b32.xlu0 %v952, 32
    %v1140 = vpop.permute.xlu0 %1139
    %1141 = vrot.lane.b32.xlu0 %v957, 32
    %v1142 = vpop.permute.xlu0 %1141
    %1143 = vrot.lane.b32.xlu0 %v960, 32
    %v1144 = vpop.permute.xlu0 %1143
    %1145 = vrot.lane.b32.xlu0 %v965, 32
    %v1146 = vpop.permute.xlu0 %1145
    %1147 = vrot.lane.b32.xlu0 %v968, 32
    %v1148 = vpop.permute.xlu0 %1147
    %1149 = vrot.lane.b32.xlu0 %v973, 32
    %v1150 = vpop.permute.xlu0 %1149
    %1151 = vrot.lane.b32.xlu0 %v976, 32
    %v1152 = vpop.permute.xlu0 %1151
    %v1161 = vmul.f32 %v285, %v1138
    %v1162 = vmul.f32 %v286, %v1140
    %v1163 = vmul.f32 %v287, %v1142
    %v1164 = vmul.f32 %v288, %v1144
    %v1165 = vmul.f32 %v289, %v1146
    %v1166 = vmul.f32 %v290, %v1148
    %v1167 = vmul.f32 %v291, %v1150
    %v1168 = vmul.f32 %v292, %v1152
    %1177 = vrot.lane.b32.xlu0 %v1161, 96
    %v1178 = vpop.permute.xlu0 %1177
    %1179 = vrot.lane.b32.xlu0 %v1162, 96
    %v1180 = vpop.permute.xlu0 %1179
    %1181 = vrot.lane.b32.xlu0 %v1163, 96
    %v1182 = vpop.permute.xlu0 %1181
    %1183 = vrot.lane.b32.xlu0 %v1164, 96
    %v1184 = vpop.permute.xlu0 %1183
    %1185 = vrot.lane.b32.xlu0 %v1165, 96
    %v1186 = vpop.permute.xlu0 %1185
    %1187 = vrot.lane.b32.xlu0 %v1166, 96
    %v1188 = vpop.permute.xlu0 %1187
    %1189 = vrot.lane.b32.xlu0 %v1167, 96
    %v1190 = vpop.permute.xlu0 %1189
    %1191 = vrot.lane.b32.xlu0 %v1168, 96
    %v1192 = vpop.permute.xlu0 %1191
    %v1201 = vsel %vm99, %v1178, 0.0
    %1202 = vadd.xlane.f32.xlu0 %v1201
    %v1203 = vpop.xlane.xlu0 %1202
    %v1204 = vsel %vm99, %v1180, 0.0
    %1205 = vadd.xlane.f32.xlu0 %v1204
    %v1206 = vpop.xlane.xlu0 %1205
    %v1207 = vsel %vm99, %v1182, 0.0
    %1208 = vadd.xlane.f32.xlu0 %v1207
    %v1209 = vpop.xlane.xlu0 %1208
    %v1210 = vsel %vm99, %v1184, 0.0
    %1211 = vadd.xlane.f32.xlu0 %v1210
    %v1212 = vpop.xlane.xlu0 %1211
    %v1213 = vsel %vm99, %v1186, 0.0
    %1214 = vadd.xlane.f32.xlu0 %v1213
    %v1215 = vpop.xlane.xlu0 %1214
    %v1216 = vsel %vm99, %v1188, 0.0
    %1217 = vadd.xlane.f32.xlu0 %v1216
    %v1218 = vpop.xlane.xlu0 %1217
    %v1219 = vsel %vm99, %v1190, 0.0
    %1220 = vadd.xlane.f32.xlu0 %v1219
    %v1221 = vpop.xlane.xlu0 %1220
    %v1222 = vsel %vm99, %v1192, 0.0
    %1223 = vadd.xlane.f32.xlu0 %v1222
    %v1224 = vpop.xlane.xlu0 %1223
    %v1225 = vadd.f32 %v1203, %v1015
    %v1226 = vadd.f32 %v1206, %v1015
    %v1227 = vadd.f32 %v1209, %v1015
    %v1228 = vadd.f32 %v1212, %v1015
    %v1229 = vadd.f32 %v1215, %v1015
    %v1230 = vadd.f32 %v1218, %v1015
    %v1231 = vadd.f32 %v1221, %v1015
    %v1232 = vadd.f32 %v1224, %v1015
    %v1233 = vmul.f32 %v285, %v949
    %v1234 = vmul.f32 %v286, %v952
    %v1235 = vmul.f32 %v287, %v957
    %v1236 = vmul.f32 %v288, %v960
    %v1237 = vmul.f32 %v289, %v965
    %v1238 = vmul.f32 %v290, %v968
    %v1239 = vmul.f32 %v291, %v973
    %v1240 = vmul.f32 %v292, %v976
    %v1241 = vsel %vm99, %v1233, 0.0
    %1242 = vadd.xlane.f32.xlu0 %v1241
    %v1243 = vpop.xlane.xlu0 %1242
    %v1244 = vsel %vm99, %v1234, 0.0
    %1245 = vadd.xlane.f32.xlu0 %v1244
    %v1246 = vpop.xlane.xlu0 %1245
    %v1247 = vsel %vm99, %v1235, 0.0
    %1248 = vadd.xlane.f32.xlu0 %v1247
    %v1249 = vpop.xlane.xlu0 %1248
    %v1250 = vsel %vm99, %v1236, 0.0
    %1251 = vadd.xlane.f32.xlu0 %v1250
    %v1252 = vpop.xlane.xlu0 %1251
    %v1253 = vsel %vm99, %v1237, 0.0
    %1254 = vadd.xlane.f32.xlu0 %v1253
    %v1255 = vpop.xlane.xlu0 %1254
    %v1256 = vsel %vm99, %v1238, 0.0
    %1257 = vadd.xlane.f32.xlu0 %v1256
    %v1258 = vpop.xlane.xlu0 %1257
    %v1259 = vsel %vm99, %v1239, 0.0
    %1260 = vadd.xlane.f32.xlu0 %v1259
    %v1261 = vpop.xlane.xlu0 %1260
    %v1262 = vsel %vm99, %v1240, 0.0
    %1263 = vadd.xlane.f32.xlu0 %v1262
    %v1264 = vpop.xlane.xlu0 %1263
    %v1265 = vadd.f32 %v1243, %v1015
    %v1266 = vadd.f32 %v1246, %v1015
    %v1267 = vadd.f32 %v1249, %v1015
    %v1268 = vadd.f32 %v1252, %v1015
    %v1269 = vadd.f32 %v1255, %v1015
    %v1270 = vadd.f32 %v1258, %v1015
    %v1271 = vadd.f32 %v1261, %v1015
    %v1272 = vadd.f32 %v1264, %v1015
    %v1273 = vlaneseq
    %v1274 = vand.u32 %v1273, 127
    %vm1275 = vcmp.eq.s32.totalorder %v1274, 0
    %v1276 = vsel %vm1275, 1, 0
    %vm1277 = vcmp.eq.s32.totalorder %v1276, 1
    %1279 = vset.pattern.permute.xlu0 0
    %1280 = vperm.xlu0 %1279, %v1017
    %v1281 = vpop.permute.xlu0 %1280
    %1284 = vset.pattern.permute.xlu0 0
    %1285 = vperm.xlu0 %1284, %v1018
    %v1286 = vpop.permute.xlu0 %1285
    %1289 = vset.pattern.permute.xlu0 0
    %1290 = vperm.xlu0 %1289, %v1019
    %v1291 = vpop.permute.xlu0 %1290
    %1294 = vset.pattern.permute.xlu0 0
    %1295 = vperm.xlu0 %1294, %v1020
    %v1296 = vpop.permute.xlu0 %1295
    %1299 = vset.pattern.permute.xlu0 0
    %1300 = vperm.xlu0 %1299, %v1021
    %v1301 = vpop.permute.xlu0 %1300
    %1304 = vset.pattern.permute.xlu0 0
    %1305 = vperm.xlu0 %1304, %v1022
    %v1306 = vpop.permute.xlu0 %1305
    %1309 = vset.pattern.permute.xlu0 0
    %1310 = vperm.xlu0 %1309, %v1023
    %v1311 = vpop.permute.xlu0 %1310
    %1314 = vset.pattern.permute.xlu0 0
    %1315 = vperm.xlu0 %1314, %v1024
    %v1316 = vpop.permute.xlu0 %1315
    %v1318 = vsel %vm1277, %v1281, 0.0
    %v1319 = vsel %vm1277, %v1286, 0.0
    %v1320 = vsel %vm1277, %v1291, 0.0
    %v1321 = vsel %vm1277, %v1296, 0.0
    %v1322 = vsel %vm1277, %v1301, 0.0
    %v1323 = vsel %vm1277, %v1306, 0.0
    %v1324 = vsel %vm1277, %v1311, 0.0
    %v1325 = vsel %vm1277, %v1316, 0.0
    %vm1326 = vcmp.eq.s32.totalorder %v1274, 1
    %v1327 = vsel %vm1326, 1, 0
    %vm1328 = vcmp.eq.s32.totalorder %v1327, 1
    %1330 = vset.pattern.permute.xlu0 0
    %1331 = vperm.xlu0 %1330, %v1121
    %v1332 = vpop.permute.xlu0 %1331
    %1335 = vset.pattern.permute.xlu0 0
    %1336 = vperm.xlu0 %1335, %v1122
    %v1337 = vpop.permute.xlu0 %1336
    %1340 = vset.pattern.permute.xlu0 0
    %1341 = vperm.xlu0 %1340, %v1123
    %v1342 = vpop.permute.xlu0 %1341
    %1345 = vset.pattern.permute.xlu0 0
    %1346 = vperm.xlu0 %1345, %v1124
    %v1347 = vpop.permute.xlu0 %1346
    %1350 = vset.pattern.permute.xlu0 0
    %1351 = vperm.xlu0 %1350, %v1125
    %v1352 = vpop.permute.xlu0 %1351
    %1355 = vset.pattern.permute.xlu0 0
    %1356 = vperm.xlu0 %1355, %v1126
    %v1357 = vpop.permute.xlu0 %1356
    %1360 = vset.pattern.permute.xlu0 0
    %1361 = vperm.xlu0 %1360, %v1127
    %v1362 = vpop.permute.xlu0 %1361
    %1365 = vset.pattern.permute.xlu0 0
    %1366 = vperm.xlu0 %1365, %v1128
    %v1367 = vpop.permute.xlu0 %1366
    %v1369 = vsel %vm1328, %v1332, 0.0
    %v1370 = vsel %vm1328, %v1337, 0.0
    %v1371 = vsel %vm1328, %v1342, 0.0
    %v1372 = vsel %vm1328, %v1347, 0.0
    %v1373 = vsel %vm1328, %v1352, 0.0
    %v1374 = vsel %vm1328, %v1357, 0.0
    %v1375 = vsel %vm1328, %v1362, 0.0
    %v1376 = vsel %vm1328, %v1367, 0.0
    %v1377 = vadd.f32 %v1318, %v1369
    %v1378 = vadd.f32 %v1319, %v1370
    %v1379 = vadd.f32 %v1320, %v1371
    %v1380 = vadd.f32 %v1321, %v1372
    %v1381 = vadd.f32 %v1322, %v1373
    %v1382 = vadd.f32 %v1323, %v1374
    %v1383 = vadd.f32 %v1324, %v1375
    %v1384 = vadd.f32 %v1325, %v1376
    %vm1385 = vcmp.eq.s32.totalorder %v1274, 2
    %v1386 = vsel %vm1385, 1, 0
    %vm1387 = vcmp.eq.s32.totalorder %v1386, 1
    %1389 = vset.pattern.permute.xlu0 0
    %1390 = vperm.xlu0 %1389, %v1225
    %v1391 = vpop.permute.xlu0 %1390
    %1394 = vset.pattern.permute.xlu0 0
    %1395 = vperm.xlu0 %1394, %v1226
    %v1396 = vpop.permute.xlu0 %1395
    %1399 = vset.pattern.permute.xlu0 0
    %1400 = vperm.xlu0 %1399, %v1227
    %v1401 = vpop.permute.xlu0 %1400
    %1404 = vset.pattern.permute.xlu0 0
    %1405 = vperm.xlu0 %1404, %v1228
    %v1406 = vpop.permute.xlu0 %1405
    %1409 = vset.pattern.permute.xlu0 0
    %1410 = vperm.xlu0 %1409, %v1229
    %v1411 = vpop.permute.xlu0 %1410
    %1414 = vset.pattern.permute.xlu0 0
    %1415 = vperm.xlu0 %1414, %v1230
    %v1416 = vpop.permute.xlu0 %1415
    %1419 = vset.pattern.permute.xlu0 0
    %1420 = vperm.xlu0 %1419, %v1231
    %v1421 = vpop.permute.xlu0 %1420
    %1424 = vset.pattern.permute.xlu0 0
    %1425 = vperm.xlu0 %1424, %v1232
    %v1426 = vpop.permute.xlu0 %1425
    %v1428 = vsel %vm1387, %v1391, 0.0
    %v1429 = vsel %vm1387, %v1396, 0.0
    %v1430 = vsel %vm1387, %v1401, 0.0
    %v1431 = vsel %vm1387, %v1406, 0.0
    %v1432 = vsel %vm1387, %v1411, 0.0
    %v1433 = vsel %vm1387, %v1416, 0.0
    %v1434 = vsel %vm1387, %v1421, 0.0
    %v1435 = vsel %vm1387, %v1426, 0.0
    %v1436 = vadd.f32 %v1377, %v1428
    %v1437 = vadd.f32 %v1378, %v1429
    %v1438 = vadd.f32 %v1379, %v1430
    %v1439 = vadd.f32 %v1380, %v1431
    %v1440 = vadd.f32 %v1381, %v1432
    %v1441 = vadd.f32 %v1382, %v1433
    %v1442 = vadd.f32 %v1383, %v1434
    %v1443 = vadd.f32 %v1384, %v1435
    %vm1444 = vcmp.eq.s32.totalorder %v1274, 3
    %v1445 = vsel %vm1444, 1, 0
    %vm1446 = vcmp.eq.s32.totalorder %v1445, 1
    %1448 = vset.pattern.permute.xlu0 0
    %1449 = vperm.xlu0 %1448, %v1265
    %v1450 = vpop.permute.xlu0 %1449
    %1453 = vset.pattern.permute.xlu0 0
    %1454 = vperm.xlu0 %1453, %v1266
    %v1455 = vpop.permute.xlu0 %1454
    %1458 = vset.pattern.permute.xlu0 0
    %1459 = vperm.xlu0 %1458, %v1267
    %v1460 = vpop.permute.xlu0 %1459
    %1463 = vset.pattern.permute.xlu0 0
    %1464 = vperm.xlu0 %1463, %v1268
    %v1465 = vpop.permute.xlu0 %1464
    %1468 = vset.pattern.permute.xlu0 0
    %1469 = vperm.xlu0 %1468, %v1269
    %v1470 = vpop.permute.xlu0 %1469
    %1473 = vset.pattern.permute.xlu0 0
    %1474 = vperm.xlu0 %1473, %v1270
    %v1475 = vpop.permute.xlu0 %1474
    %1478 = vset.pattern.permute.xlu0 0
    %1479 = vperm.xlu0 %1478, %v1271
    %v1480 = vpop.permute.xlu0 %1479
    %1483 = vset.pattern.permute.xlu0 0
    %1484 = vperm.xlu0 %1483, %v1272
    %v1485 = vpop.permute.xlu0 %1484
    %v1487 = vsel %vm1446, %v1450, 0.0
    %v1488 = vsel %vm1446, %v1455, 0.0
    %v1489 = vsel %vm1446, %v1460, 0.0
    %v1490 = vsel %vm1446, %v1465, 0.0
    %v1491 = vsel %vm1446, %v1470, 0.0
    %v1492 = vsel %vm1446, %v1475, 0.0
    %v1493 = vsel %vm1446, %v1480, 0.0
    %v1494 = vsel %vm1446, %v1485, 0.0
    %v1495 = vadd.f32 %v1436, %v1487
    %v1496 = vadd.f32 %v1437, %v1488
    %v1497 = vadd.f32 %v1438, %v1489
    %v1498 = vadd.f32 %v1439, %v1490
    %v1499 = vadd.f32 %v1440, %v1491
    %v1500 = vadd.f32 %v1441, %v1492
    %v1501 = vadd.f32 %v1442, %v1493
    %v1502 = vadd.f32 %v1443, %v1494
    %1511 = vrot.lane.b32.xlu0 %v465, 32
    %v1512 = vpop.permute.xlu0 %1511
    %1513 = vrot.lane.b32.xlu0 %v466, 32
    %v1514 = vpop.permute.xlu0 %1513
    %1515 = vrot.lane.b32.xlu0 %v467, 32
    %v1516 = vpop.permute.xlu0 %1515
    %1517 = vrot.lane.b32.xlu0 %v468, 32
    %v1518 = vpop.permute.xlu0 %1517
    %1519 = vrot.lane.b32.xlu0 %v469, 32
    %v1520 = vpop.permute.xlu0 %1519
    %1521 = vrot.lane.b32.xlu0 %v470, 32
    %v1522 = vpop.permute.xlu0 %1521
    %1523 = vrot.lane.b32.xlu0 %v471, 32
    %v1524 = vpop.permute.xlu0 %1523
    %1525 = vrot.lane.b32.xlu0 %v472, 32
    %v1526 = vpop.permute.xlu0 %1525
    %1543 = vrot.lane.b32.xlu0 %v1495, 48
    %v1544 = vpop.permute.xlu0 %1543
    %1545 = vrot.lane.b32.xlu0 %v1496, 48
    %v1546 = vpop.permute.xlu0 %1545
    %1547 = vrot.lane.b32.xlu0 %v1497, 48
    %v1548 = vpop.permute.xlu0 %1547
    %1549 = vrot.lane.b32.xlu0 %v1498, 48
    %v1550 = vpop.permute.xlu0 %1549
    %1551 = vrot.lane.b32.xlu0 %v1499, 48
    %v1552 = vpop.permute.xlu0 %1551
    %1553 = vrot.lane.b32.xlu0 %v1500, 48
    %v1554 = vpop.permute.xlu0 %1553
    %1555 = vrot.lane.b32.xlu0 %v1501, 48
    %v1556 = vpop.permute.xlu0 %1555
    %1557 = vrot.lane.b32.xlu0 %v1502, 48
    %v1558 = vpop.permute.xlu0 %1557
    %v1567 = vsel %vm99, %v285, %v1512
    %v1568 = vsel %vm99, %v286, %v1514
    %v1569 = vsel %vm99, %v287, %v1516
    %v1570 = vsel %vm99, %v288, %v1518
    %v1571 = vsel %vm99, %v289, %v1520
    %v1572 = vsel %vm99, %v290, %v1522
    %v1573 = vsel %vm99, %v291, %v1524
    %v1574 = vsel %vm99, %v292, %v1526
    %vm1575 = vcmask 392192
    %v1576 = vsel %vm1575, %v1567, %v1544
    %v1577 = vsel %vm1575, %v1568, %v1546
    %v1578 = vsel %vm1575, %v1569, %v1548
    %v1579 = vsel %vm1575, %v1570, %v1550
    %v1580 = vsel %vm1575, %v1571, %v1552
    %v1581 = vsel %vm1575, %v1572, %v1554
    %v1582 = vsel %vm1575, %v1573, %v1556
    %v1583 = vsel %vm1575, %v1574, %v1558
    %vm1584 = vcmask 424960
    %v1585 = vsel %vm1584, %v1576, 0.0
    %v1586 = vsel %vm1584, %v1577, 0.0
    %v1587 = vsel %vm1584, %v1578, 0.0
    %v1588 = vsel %vm1584, %v1579, 0.0
    %v1589 = vsel %vm1584, %v1580, 0.0
    %v1590 = vsel %vm1584, %v1581, 0.0
    %v1591 = vsel %vm1584, %v1582, 0.0
    %v1592 = vsel %vm1584, %v1583, 0.0
    %1593 = vst [vmem:[#allocation3] sm:$0xff] %v1585
    %1594 = vst [vmem:[#allocation3 + $0x8] sm:$0xff] %v1586
    %1595 = vst [vmem:[#allocation3 + $0x10] sm:$0xff] %v1587
    %1596 = vst [vmem:[#allocation3 + $0x18] sm:$0xff] %v1588
    %1597 = vst [vmem:[#allocation3 + $0x20] sm:$0xff] %v1589
    %1598 = vst [vmem:[#allocation3 + $0x28] sm:$0xff] %v1590
    %1599 = vst [vmem:[#allocation3 + $0x30] sm:$0xff] %v1591
    %1600 = vst [vmem:[#allocation3 + $0x38] sm:$0xff] %v1592
    // Predicated region
    $region38: #{tpu_custom_call.1} parent=1 // pred_check
      _
    $region39: #{tpu_custom_call.1} parent=1 // pred_check_branch
      %1602 = sbr.rel (0) target = $region41
    $region40: #{tpu_custom_call.1} parent=1 // pred_region
      %s1604 = ssub.s32 1024, 1024
      %1605 = vsyncadd [#allocation4], %s1604
      %s1606 = sshll.u32 [#allocation3], 4
      %s1607 = int_to_ptr.vmem [resolvable:$true] %s1606
      %1612 = dma.vmem_to_hbm [thread:$0]  %s1607, 1024, %s9, [#allocation4], 128, 128, 8
    $region41: #{tpu_custom_call.1} parent=1 // pred_fallthru
      _
    // Predicated region
    $region42: #{tpu_custom_call.1} parent=1 // pred_check
      _
    $region43: #{tpu_custom_call.1} parent=1 // pred_check_branch
      %1614 = sbr.rel (0) target = $region45
    $region44: #{tpu_custom_call.1} parent=1 // pred_region
      %1615 = dma.done [#allocation4], 1024
    $region45: #{tpu_custom_call.1} parent=1 // pred_fallthru
      _
    %1616 = vsyncpa [#allocation4], 1

</llo_original>
